<compile_context>
chip_gen: v5e
topology: v5e:2x2
jax: 0.10.0
libtpu: 0.0.40
codegen_flags: <defaults>
</compile_context>

<pallas_src>
import functools
import math

import jax
import jax.numpy as jnp
from jax.experimental import pallas as pl
from jax.experimental.pallas import tpu as pltpu


def _attention_block_kernel(x_ref, gamma_ref, wqkv_ref, bqkv_ref,
                            wproj_ref, bproj_ref, o_ref, *, n_frames, n_pos):
    """One grid step = one batch element b; processes its T frames.

    Channel-major layout, M = n_frames * n_pos (all frames laid out along lanes):
      x_ref:     (C, M)  f32   original input (residual source)
      gamma_ref: (C, 1)  f32   RMS_norm gamma, pre-multiplied by sqrt(C)
      wqkv_ref:  (3C, C) bf16  fused [Wq; Wk; Wv]; Wq rows pre-scaled by 1/sqrt(C)
      bqkv_ref:  (3C, 1) f32   fused [bq; bk; bv]; bq pre-scaled by 1/sqrt(C)
      wproj_ref: (C, C)  bf16  output projection (conv layout: out x in)
      bproj_ref: (C, 1)  f32
      o_ref:     (C, M)  f32
    """
    C = x_ref.shape[0]

    # Hoist parameter loads (and their broadcasts) out of the per-frame loop.
    gamma = gamma_ref[...]                # (C, 1) f32, already * sqrt(C)
    w_qkv = wqkv_ref[...]                 # (3C, C) bf16
    b_qkv = bqkv_ref[...]                 # (3C, 1) f32
    w_prj = wproj_ref[...]                # (C, C) bf16
    b_prj = bproj_ref[...]                # (C, 1) f32

    x = x_ref[...]                        # (C, M) f32

    # RMS_norm(images=True, channel_first): F.normalize over channels * sqrt(C) * gamma.
    # rsqrt(max(ss, eps^2)) == 1 / max(||x||, 1e-12), matching F.normalize's clamp.
    ss = jnp.sum(x * x, axis=0, keepdims=True)                       # (1, M)
    xn = (x * jax.lax.rsqrt(jnp.maximum(ss, 1e-24)) * gamma)         # (C, M)
    xn = xn.astype(jnp.bfloat16)

    # Fused QKV 1x1 conv for all frames at once: (3C, C) @ (C, M), f32 accumulate.
    qkv = jnp.dot(w_qkv, xn, preferred_element_type=jnp.float32) + b_qkv  # (3C, M) f32

    # Per-frame single-head attention (non-causal, scale already folded into q).
    # TODO(synk): for large frames (h*w >= ~64^2) replace the full (N, N) score
    # matrix with a KV-tiled online softmax so it stays within VMEM on v7x.
    a_frames = []
    for f in range(n_frames):             # static unroll; T is small here
        lo = f * n_pos
        hi = lo + n_pos
        q = qkv[0 * C:1 * C, lo:hi]        # (C, N) f32, already / sqrt(C)
        k = qkv[1 * C:2 * C, lo:hi]        # (C, N)
        v = qkv[2 * C:3 * C, lo:hi]        # (C, N)

        # Scores (N, N): contract over channels; tiny q transpose keeps a plain matmul.
        s = jnp.dot(q.T.astype(jnp.bfloat16), k.astype(jnp.bfloat16),
                    preferred_element_type=jnp.float32)              # (N, N) f32

        m = jnp.max(s, axis=-1, keepdims=True)
        p = jnp.exp(s - m)
        p = p * pl.reciprocal(jnp.sum(p, axis=-1, keepdims=True), approx=True)

        # a[c, n] = sum_m v[c, m] * p[n, m]  -> back in channel-major layout.
        a = jax.lax.dot_general(v.astype(jnp.bfloat16), p.astype(jnp.bfloat16),
                                (((1,), (1,)), ((), ())),
                                preferred_element_type=jnp.float32)  # (C, N) f32
        a_frames.append(a.astype(jnp.bfloat16))

    a_all = jnp.concatenate(a_frames, axis=1)                        # (C, M) bf16

    # Output projection (1x1 conv) for all frames + residual with the ORIGINAL x.
    y = jnp.dot(w_prj, a_all, preferred_element_type=jnp.float32) + b_prj  # (C, M)
    o_ref[...] = (y + x).astype(o_ref.dtype)                         # lane-dense store


def attention_block_pallas(x_bcm, gamma, w_qkv, b_qkv, w_prj, b_prj, *, n_frames, n_pos):
    """x_bcm: (B, C, M) f32 with M = n_frames * n_pos. Returns (B, C, M)."""
    B, C, M = x_bcm.shape
    kernel = functools.partial(_attention_block_kernel,
                               n_frames=n_frames, n_pos=n_pos)
    return pl.pallas_call(
        kernel,
        out_shape=jax.ShapeDtypeStruct((B, C, M), x_bcm.dtype),
        grid_spec=pltpu.PrefetchScalarGridSpec(
            num_scalar_prefetch=0,
            grid=(B,),
            in_specs=[
                pl.BlockSpec((None, C, M), lambda i: (i, 0, 0)),   # x (one batch elem)
                pl.BlockSpec((C, 1), lambda i: (0, 0)),            # gamma * sqrt(C)
                pl.BlockSpec((3 * C, C), lambda i: (0, 0)),        # fused Wqkv (bf16)
                pl.BlockSpec((3 * C, 1), lambda i: (0, 0)),        # fused bqkv
                pl.BlockSpec((C, C), lambda i: (0, 0)),            # Wproj (bf16)
                pl.BlockSpec((C, 1), lambda i: (0, 0)),            # bproj
            ],
            out_specs=pl.BlockSpec((None, C, M), lambda i: (i, 0, 0)),
        ),
        compiler_params=pltpu.CompilerParams(
            dimension_semantics=("parallel",),        # shards batch across TCs on v7x
            vmem_limit_bytes=48 * 1024 * 1024),
    )(x_bcm, gamma, w_qkv, b_qkv, w_prj, b_prj)


def attention_block(x_ncthw, params):
    """Full module forward. x_ncthw: (b, c, t, h, w) f32. Returns same shape."""
    b, c, t, h, w = x_ncthw.shape
    n = h * w
    # Trailing-dim merge only: free reshape, no HBM transpose.
    x_bcm = x_ncthw.reshape(b, c, t * n)

    # --- wrapper-side parameter packing / scale folding (done once, tiny) ---
    inv_scale = 1.0 / math.sqrt(c)
    w_qkv = jnp.concatenate(
        [params["w_qkv"][:c] * inv_scale, params["w_qkv"][c:]], axis=0
    ).astype(jnp.bfloat16)                                             # (3c, c)
    b_qkv = jnp.concatenate(
        [params["b_qkv"][:c] * inv_scale, params["b_qkv"][c:]], axis=0
    ).reshape(3 * c, 1).astype(jnp.float32)                            # (3c, 1)
    gamma = (params["gamma"].reshape(c, 1) * math.sqrt(c)).astype(jnp.float32)
    w_prj = params["w_proj"].astype(jnp.bfloat16)                      # (c, c)
    b_prj = params["b_proj"].reshape(c, 1).astype(jnp.float32)         # (c, 1)

    y = attention_block_pallas(x_bcm, gamma, w_qkv, b_qkv, w_prj, b_prj,
                               n_frames=t, n_pos=n)
    return y.reshape(b, c, t, h, w)                                    # free reshape


def _reference(x_ncthw, params):
    """Pure-JAX f32 reference replicating the PyTorch forward exactly."""
    b, c, t, h, w = x_ncthw.shape
    xf = x_ncthw.reshape(b, c, t, h * w)
    nrm = jnp.sqrt(jnp.sum(xf * xf, axis=1, keepdims=True))
    xn = xf / jnp.maximum(nrm, 1e-12) * jnp.sqrt(jnp.float32(c)) \
        * params["gamma"].reshape(1, c, 1, 1)
    qkv = jnp.einsum("oc,bctn->botn", params["w_qkv"], xn) \
        + params["b_qkv"].reshape(1, 3 * c, 1, 1)
    q, k, v = qkv[:, :c], qkv[:, c:2 * c], qkv[:, 2 * c:]
    s = jnp.einsum("bctn,bctm->btnm", q, k) / jnp.sqrt(jnp.float32(c))
    p = jax.nn.softmax(s, axis=-1)
    a = jnp.einsum("bctm,btnm->bctn", v, p)
    y = jnp.einsum("oc,bctn->botn", params["w_proj"], a) \
        + params["b_proj"].reshape(1, c, 1, 1)
    return (y + xf).reshape(b, c, t, h, w)


if __name__ == "__main__":
    # Small shapes consistent with the module: dim = c = 32, b = 2, t = 4, h = w = 8.
    b, c, t, h, w = 2, 32, 4, 8, 8
    key = jax.random.PRNGKey(0)
    k_x, k_g, k_w1, k_b1, k_w2, k_b2 = jax.random.split(key, 6)

    x = jax.random.normal(k_x, (b, c, t, h, w), dtype=jnp.float32)

    # Parameters in PyTorch layout: Conv2d(dim, 3*dim, 1) / Conv2d(dim, dim, 1)
    # weights with the 1x1 kernel dims squeezed -> (out, in); RMS_norm gamma per channel.
    params = {
        "gamma": 1.0 + 0.1 * jax.random.normal(k_g, (c,), jnp.float32),
        "w_qkv": 0.05 * jax.random.normal(k_w1, (3 * c, c), jnp.float32),
        "b_qkv": 0.01 * jax.random.normal(k_b1, (3 * c,), jnp.float32),
        "w_proj": 0.05 * jax.random.normal(k_w2, (c, c), jnp.float32),
        "b_proj": 0.01 * jax.random.normal(k_b2, (c,), jnp.float32),
    }

    out = jax.block_until_ready(attention_block(x, params))
    ref = _reference(x, params)

    assert out.shape == (b, c, t, h, w)
    max_err = float(jnp.max(jnp.abs(out - ref)))
    # bf16 MXU operands + approx reciprocal => loosened tolerance vs. f32 reference.
    assert jnp.allclose(out, ref, atol=2e-2, rtol=2e-2), f"max |err| = {max_err}"
    print("KERNEL_OK")
</pallas_src>

<mosaic_0001>
module attributes {stable_mosaic.version = 11 : i64} {
  func.func @_attention_block_kernel(%arg0: i32, %arg1: memref<1x32x256xf32, #tpu.memory_space<vmem>>, %arg2: memref<32x1xf32, #tpu.memory_space<vmem>>, %arg3: memref<96x32xbf16, #tpu.memory_space<vmem>>, %arg4: memref<96x1xf32, #tpu.memory_space<vmem>>, %arg5: memref<32x32xbf16, #tpu.memory_space<vmem>>, %arg6: memref<32x1xf32, #tpu.memory_space<vmem>>, %arg7: memref<1x32x256xf32, #tpu.memory_space<vmem>>) attributes {dimension_semantics = [#tpu.dimension_semantics<parallel>], iteration_bounds = array<i64: 2>, scalar_prefetch = 0 : i64, scratch_operands = 0 : i64, tpu.core_type = #tpu.core_type<tc>, window_params = [{transform_indices = @transform_0, window_bounds = array<i64: 1, 32, 256>}, {pipeline_mode = #tpu.pipeline_mode<synchronous>, transform_indices = @transform_1, window_bounds = array<i64: 32, 1>}, {pipeline_mode = #tpu.pipeline_mode<synchronous>, transform_indices = @transform_2, window_bounds = array<i64: 96, 32>}, {pipeline_mode = #tpu.pipeline_mode<synchronous>, transform_indices = @transform_3, window_bounds = array<i64: 96, 1>}, {pipeline_mode = #tpu.pipeline_mode<synchronous>, transform_indices = @transform_4, window_bounds = array<i64: 32, 32>}, {pipeline_mode = #tpu.pipeline_mode<synchronous>, transform_indices = @transform_5, window_bounds = array<i64: 32, 1>}, {transform_indices = @transform_6, window_bounds = array<i64: 1, 32, 256>}]} {
    %c0 = arith.constant 0 : index
    %c0_0 = arith.constant 0 : index
    %0 = vector.load %arg2[%c0, %c0_0] : memref<32x1xf32, #tpu.memory_space<vmem>>, vector<32x1xf32>
    %c0_1 = arith.constant 0 : index
    %c0_2 = arith.constant 0 : index
    %1 = vector.load %arg3[%c0_1, %c0_2] : memref<96x32xbf16, #tpu.memory_space<vmem>>, vector<96x32xbf16>
    %c0_3 = arith.constant 0 : index
    %c0_4 = arith.constant 0 : index
    %2 = vector.load %arg4[%c0_3, %c0_4] : memref<96x1xf32, #tpu.memory_space<vmem>>, vector<96x1xf32>
    %c0_5 = arith.constant 0 : index
    %c0_6 = arith.constant 0 : index
    %3 = vector.load %arg5[%c0_5, %c0_6] : memref<32x32xbf16, #tpu.memory_space<vmem>>, vector<32x32xbf16>
    %c0_7 = arith.constant 0 : index
    %c0_8 = arith.constant 0 : index
    %4 = vector.load %arg6[%c0_7, %c0_8] : memref<32x1xf32, #tpu.memory_space<vmem>>, vector<32x1xf32>
    %c0_9 = arith.constant 0 : index
    %c0_10 = arith.constant 0 : index
    %c0_11 = arith.constant 0 : index
    %5 = vector.load %arg1[%c0_9, %c0_10, %c0_11] : memref<1x32x256xf32, #tpu.memory_space<vmem>>, vector<1x32x256xf32>
    %6 = vector.shape_cast %5 : vector<1x32x256xf32> to vector<32x256xf32>
    %7 = arith.mulf %6, %6 : vector<32x256xf32>
    %cst = arith.constant dense<0.000000e+00> : vector<256xf32>
    %8 = vector.multi_reduction <add>, %7, %cst [0] : vector<32x256xf32> to vector<256xf32>
    %9 = vector.shape_cast %8 : vector<256xf32> to vector<1x256xf32>
    %cst_12 = arith.constant 1.000000e-24 : f32
    %10 = vector.broadcast %cst_12 : f32 to vector<1x256xf32>
    %11 = arith.maximumf %9, %10 : vector<1x256xf32>
    %12 = math.rsqrt %11 : vector<1x256xf32>
    %13 = vector.broadcast %12 : vector<1x256xf32> to vector<32x256xf32>
    %14 = arith.mulf %6, %13 : vector<32x256xf32>
    %15 = vector.broadcast %0 : vector<32x1xf32> to vector<32x256xf32>
    %16 = arith.mulf %14, %15 : vector<32x256xf32>
    %17 = arith.truncf %16 : vector<32x256xf32> to vector<32x256xbf16>
    %cst_13 = arith.constant dense<0.000000e+00> : vector<96x256xf32>
    %18 = tpu.matmul %1, %17, %cst_13 {dimension_numbers = #tpu.dot_dimension_numbers<[1], [0], [0], [1], [0, 0, 1, 1], [], []>} : vector<96x32xbf16>, vector<32x256xbf16>, vector<96x256xf32> -> vector<96x256xf32>
    %19 = vector.broadcast %2 : vector<96x1xf32> to vector<96x256xf32>
    %20 = arith.addf %18, %19 : vector<96x256xf32>
    %21 = vector.extract_strided_slice %20 {offsets = [0, 0], sizes = [32, 64], strides = [1, 1]} : vector<96x256xf32> to vector<32x64xf32>
    %22 = vector.extract_strided_slice %20 {offsets = [32, 0], sizes = [32, 64], strides = [1, 1]} : vector<96x256xf32> to vector<32x64xf32>
    %23 = vector.extract_strided_slice %20 {offsets = [64, 0], sizes = [32, 64], strides = [1, 1]} : vector<96x256xf32> to vector<32x64xf32>
    %24 = tpu.transpose %21, [1, 0] : vector<32x64xf32> -> vector<64x32xf32>
    %25 = arith.truncf %24 : vector<64x32xf32> to vector<64x32xbf16>
    %26 = arith.truncf %22 : vector<32x64xf32> to vector<32x64xbf16>
    %cst_14 = arith.constant dense<0.000000e+00> : vector<64x64xf32>
    %27 = tpu.matmul %25, %26, %cst_14 {dimension_numbers = #tpu.dot_dimension_numbers<[1], [0], [0], [1], [0, 0, 1, 1], [], []>} : vector<64x32xbf16>, vector<32x64xbf16>, vector<64x64xf32> -> vector<64x64xf32>
    %cst_15 = arith.constant dense<0xFF800000> : vector<64xf32>
    %28 = vector.multi_reduction <maximumf>, %27, %cst_15 [1] : vector<64x64xf32> to vector<64xf32>
    %29 = vector.shape_cast %28 : vector<64xf32> to vector<64x1xf32>
    %30 = vector.broadcast %29 : vector<64x1xf32> to vector<64x64xf32>
    %31 = arith.subf %27, %30 : vector<64x64xf32>
    %32 = math.exp %31 : vector<64x64xf32>
    %cst_16 = arith.constant dense<0.000000e+00> : vector<64xf32>
    %33 = vector.multi_reduction <add>, %32, %cst_16 [1] : vector<64x64xf32> to vector<64xf32>
    %34 = vector.shape_cast %33 : vector<64xf32> to vector<64x1xf32>
    %35 = tpu.reciprocal %34 {approx = true} : vector<64x1xf32> -> vector<64x1xf32>
    %36 = vector.broadcast %35 : vector<64x1xf32> to vector<64x64xf32>
    %37 = arith.mulf %32, %36 : vector<64x64xf32>
    %38 = arith.truncf %23 : vector<32x64xf32> to vector<32x64xbf16>
    %39 = arith.truncf %37 : vector<64x64xf32> to vector<64x64xbf16>
    %cst_17 = arith.constant dense<0.000000e+00> : vector<32x64xf32>
    %40 = tpu.matmul %38, %39, %cst_17 {dimension_numbers = #tpu.dot_dimension_numbers<[1], [1], [0], [0], [0, 0, 1, 0], [], []>} : vector<32x64xbf16>, vector<64x64xbf16>, vector<32x64xf32> -> vector<32x64xf32>
    %41 = arith.truncf %40 : vector<32x64xf32> to vector<32x64xbf16>
    %42 = vector.extract_strided_slice %20 {offsets = [0, 64], sizes = [32, 64], strides = [1, 1]} : vector<96x256xf32> to vector<32x64xf32>
    %43 = vector.extract_strided_slice %20 {offsets = [32, 64], sizes = [32, 64], strides = [1, 1]} : vector<96x256xf32> to vector<32x64xf32>
    %44 = vector.extract_strided_slice %20 {offsets = [64, 64], sizes = [32, 64], strides = [1, 1]} : vector<96x256xf32> to vector<32x64xf32>
    %45 = tpu.transpose %42, [1, 0] : vector<32x64xf32> -> vector<64x32xf32>
    %46 = arith.truncf %45 : vector<64x32xf32> to vector<64x32xbf16>
    %47 = arith.truncf %43 : vector<32x64xf32> to vector<32x64xbf16>
    %cst_18 = arith.constant dense<0.000000e+00> : vector<64x64xf32>
    %48 = tpu.matmul %46, %47, %cst_18 {dimension_numbers = #tpu.dot_dimension_numbers<[1], [0], [0], [1], [0, 0, 1, 1], [], []>} : vector<64x32xbf16>, vector<32x64xbf16>, vector<64x64xf32> -> vector<64x64xf32>
    %cst_19 = arith.constant dense<0xFF800000> : vector<64xf32>
    %49 = vector.multi_reduction <maximumf>, %48, %cst_19 [1] : vector<64x64xf32> to vector<64xf32>
    %50 = vector.shape_cast %49 : vector<64xf32> to vector<64x1xf32>
    %51 = vector.broadcast %50 : vector<64x1xf32> to vector<64x64xf32>
    %52 = arith.subf %48, %51 : vector<64x64xf32>
    %53 = math.exp %52 : vector<64x64xf32>
    %cst_20 = arith.constant dense<0.000000e+00> : vector<64xf32>
    %54 = vector.multi_reduction <add>, %53, %cst_20 [1] : vector<64x64xf32> to vector<64xf32>
    %55 = vector.shape_cast %54 : vector<64xf32> to vector<64x1xf32>
    %56 = tpu.reciprocal %55 {approx = true} : vector<64x1xf32> -> vector<64x1xf32>
    %57 = vector.broadcast %56 : vector<64x1xf32> to vector<64x64xf32>
    %58 = arith.mulf %53, %57 : vector<64x64xf32>
    %59 = arith.truncf %44 : vector<32x64xf32> to vector<32x64xbf16>
    %60 = arith.truncf %58 : vector<64x64xf32> to vector<64x64xbf16>
    %cst_21 = arith.constant dense<0.000000e+00> : vector<32x64xf32>
    %61 = tpu.matmul %59, %60, %cst_21 {dimension_numbers = #tpu.dot_dimension_numbers<[1], [1], [0], [0], [0, 0, 1, 0], [], []>} : vector<32x64xbf16>, vector<64x64xbf16>, vector<32x64xf32> -> vector<32x64xf32>
    %62 = arith.truncf %61 : vector<32x64xf32> to vector<32x64xbf16>
    %63 = vector.extract_strided_slice %20 {offsets = [0, 128], sizes = [32, 64], strides = [1, 1]} : vector<96x256xf32> to vector<32x64xf32>
    %64 = vector.extract_strided_slice %20 {offsets = [32, 128], sizes = [32, 64], strides = [1, 1]} : vector<96x256xf32> to vector<32x64xf32>
    %65 = vector.extract_strided_slice %20 {offsets = [64, 128], sizes = [32, 64], strides = [1, 1]} : vector<96x256xf32> to vector<32x64xf32>
    %66 = tpu.transpose %63, [1, 0] : vector<32x64xf32> -> vector<64x32xf32>
    %67 = arith.truncf %66 : vector<64x32xf32> to vector<64x32xbf16>
    %68 = arith.truncf %64 : vector<32x64xf32> to vector<32x64xbf16>
    %cst_22 = arith.constant dense<0.000000e+00> : vector<64x64xf32>
    %69 = tpu.matmul %67, %68, %cst_22 {dimension_numbers = #tpu.dot_dimension_numbers<[1], [0], [0], [1], [0, 0, 1, 1], [], []>} : vector<64x32xbf16>, vector<32x64xbf16>, vector<64x64xf32> -> vector<64x64xf32>
    %cst_23 = arith.constant dense<0xFF800000> : vector<64xf32>
    %70 = vector.multi_reduction <maximumf>, %69, %cst_23 [1] : vector<64x64xf32> to vector<64xf32>
    %71 = vector.shape_cast %70 : vector<64xf32> to vector<64x1xf32>
    %72 = vector.broadcast %71 : vector<64x1xf32> to vector<64x64xf32>
    %73 = arith.subf %69, %72 : vector<64x64xf32>
    %74 = math.exp %73 : vector<64x64xf32>
    %cst_24 = arith.constant dense<0.000000e+00> : vector<64xf32>
    %75 = vector.multi_reduction <add>, %74, %cst_24 [1] : vector<64x64xf32> to vector<64xf32>
    %76 = vector.shape_cast %75 : vector<64xf32> to vector<64x1xf32>
    %77 = tpu.reciprocal %76 {approx = true} : vector<64x1xf32> -> vector<64x1xf32>
    %78 = vector.broadcast %77 : vector<64x1xf32> to vector<64x64xf32>
    %79 = arith.mulf %74, %78 : vector<64x64xf32>
    %80 = arith.truncf %65 : vector<32x64xf32> to vector<32x64xbf16>
    %81 = arith.truncf %79 : vector<64x64xf32> to vector<64x64xbf16>
    %cst_25 = arith.constant dense<0.000000e+00> : vector<32x64xf32>
    %82 = tpu.matmul %80, %81, %cst_25 {dimension_numbers = #tpu.dot_dimension_numbers<[1], [1], [0], [0], [0, 0, 1, 0], [], []>} : vector<32x64xbf16>, vector<64x64xbf16>, vector<32x64xf32> -> vector<32x64xf32>
    %83 = arith.truncf %82 : vector<32x64xf32> to vector<32x64xbf16>
    %84 = vector.extract_strided_slice %20 {offsets = [0, 192], sizes = [32, 64], strides = [1, 1]} : vector<96x256xf32> to vector<32x64xf32>
    %85 = vector.extract_strided_slice %20 {offsets = [32, 192], sizes = [32, 64], strides = [1, 1]} : vector<96x256xf32> to vector<32x64xf32>
    %86 = vector.extract_strided_slice %20 {offsets = [64, 192], sizes = [32, 64], strides = [1, 1]} : vector<96x256xf32> to vector<32x64xf32>
    %87 = tpu.transpose %84, [1, 0] : vector<32x64xf32> -> vector<64x32xf32>
    %88 = arith.truncf %87 : vector<64x32xf32> to vector<64x32xbf16>
    %89 = arith.truncf %85 : vector<32x64xf32> to vector<32x64xbf16>
    %cst_26 = arith.constant dense<0.000000e+00> : vector<64x64xf32>
    %90 = tpu.matmul %88, %89, %cst_26 {dimension_numbers = #tpu.dot_dimension_numbers<[1], [0], [0], [1], [0, 0, 1, 1], [], []>} : vector<64x32xbf16>, vector<32x64xbf16>, vector<64x64xf32> -> vector<64x64xf32>
    %cst_27 = arith.constant dense<0xFF800000> : vector<64xf32>
    %91 = vector.multi_reduction <maximumf>, %90, %cst_27 [1] : vector<64x64xf32> to vector<64xf32>
    %92 = vector.shape_cast %91 : vector<64xf32> to vector<64x1xf32>
    %93 = vector.broadcast %92 : vector<64x1xf32> to vector<64x64xf32>
    %94 = arith.subf %90, %93 : vector<64x64xf32>
    %95 = math.exp %94 : vector<64x64xf32>
    %cst_28 = arith.constant dense<0.000000e+00> : vector<64xf32>
    %96 = vector.multi_reduction <add>, %95, %cst_28 [1] : vector<64x64xf32> to vector<64xf32>
    %97 = vector.shape_cast %96 : vector<64xf32> to vector<64x1xf32>
    %98 = tpu.reciprocal %97 {approx = true} : vector<64x1xf32> -> vector<64x1xf32>
    %99 = vector.broadcast %98 : vector<64x1xf32> to vector<64x64xf32>
    %100 = arith.mulf %95, %99 : vector<64x64xf32>
    %101 = arith.truncf %86 : vector<32x64xf32> to vector<32x64xbf16>
    %102 = arith.truncf %100 : vector<64x64xf32> to vector<64x64xbf16>
    %cst_29 = arith.constant dense<0.000000e+00> : vector<32x64xf32>
    %103 = tpu.matmul %101, %102, %cst_29 {dimension_numbers = #tpu.dot_dimension_numbers<[1], [1], [0], [0], [0, 0, 1, 0], [], []>} : vector<32x64xbf16>, vector<64x64xbf16>, vector<32x64xf32> -> vector<32x64xf32>
    %104 = arith.truncf %103 : vector<32x64xf32> to vector<32x64xbf16>
    %105 = tpu.concatenate %41, %62, %83, %104 in 1 : vector<32x64xbf16>, vector<32x64xbf16>, vector<32x64xbf16>, vector<32x64xbf16> -> vector<32x256xbf16>
    %cst_30 = arith.constant dense<0.000000e+00> : vector<32x256xf32>
    %106 = tpu.matmul %3, %105, %cst_30 {dimension_numbers = #tpu.dot_dimension_numbers<[1], [0], [0], [1], [0, 0, 1, 1], [], []>} : vector<32x32xbf16>, vector<32x256xbf16>, vector<32x256xf32> -> vector<32x256xf32>
    %107 = vector.broadcast %4 : vector<32x1xf32> to vector<32x256xf32>
    %108 = arith.addf %106, %107 : vector<32x256xf32>
    %109 = arith.addf %108, %6 : vector<32x256xf32>
    %c0_31 = arith.constant 0 : index
    %c0_32 = arith.constant 0 : index
    %c0_33 = arith.constant 0 : index
    %110 = vector.load %arg7[%c0_31, %c0_32, %c0_33] : memref<1x32x256xf32, #tpu.memory_space<vmem>>, vector<1x32x256xf32>
    %111 = vector.shape_cast %110 : vector<1x32x256xf32> to vector<32x256xf32>
    %112 = vector.shape_cast %109 : vector<32x256xf32> to vector<1x32x256xf32>
    tpu.vector_store %arg7[%c0_31, %c0_32, %c0_33], %112 {strides = array<i32>} : memref<1x32x256xf32, #tpu.memory_space<vmem>>, vector<1x32x256xf32>,
    return
  }
  func.func @transform_0(%arg0: i32) -> (i32, i32, i32) {
    %c0_i32 = arith.constant 0 : i32
    %c0_i32_0 = arith.constant 0 : i32
    %c0_i32_1 = arith.constant 0 : i32
    return %arg0, %c0_i32, %c0_i32_0 : i32, i32, i32
  }
  func.func @transform_1(%arg0: i32) -> (i32, i32) {
    %c0_i32 = arith.constant 0 : i32
    %c0_i32_0 = arith.constant 0 : i32
    %c0_i32_1 = arith.constant 0 : i32
    return %c0_i32, %c0_i32_0 : i32, i32
  }
  func.func @transform_2(%arg0: i32) -> (i32, i32) {
    %c0_i32 = arith.constant 0 : i32
    %c0_i32_0 = arith.constant 0 : i32
    %c0_i32_1 = arith.constant 0 : i32
    return %c0_i32, %c0_i32_0 : i32, i32
  }
  func.func @transform_3(%arg0: i32) -> (i32, i32) {
    %c0_i32 = arith.constant 0 : i32
    %c0_i32_0 = arith.constant 0 : i32
    %c0_i32_1 = arith.constant 0 : i32
    return %c0_i32, %c0_i32_0 : i32, i32
  }
  func.func @transform_4(%arg0: i32) -> (i32, i32) {
    %c0_i32 = arith.constant 0 : i32
    %c0_i32_0 = arith.constant 0 : i32
    %c0_i32_1 = arith.constant 0 : i32
    return %c0_i32, %c0_i32_0 : i32, i32
  }
  func.func @transform_5(%arg0: i32) -> (i32, i32) {
    %c0_i32 = arith.constant 0 : i32
    %c0_i32_0 = arith.constant 0 : i32
    %c0_i32_1 = arith.constant 0 : i32
    return %c0_i32, %c0_i32_0 : i32, i32
  }
  func.func @transform_6(%arg0: i32) -> (i32, i32, i32) {
    %c0_i32 = arith.constant 0 : i32
    %c0_i32_0 = arith.constant 0 : i32
    %c0_i32_1 = arith.constant 0 : i32
    return %arg0, %c0_i32, %c0_i32_0 : i32, i32, i32
  }
}

</mosaic_0001>

<llo_original>
// kernel: tpu_custom_call.1
$region0: #{tpu_custom_call.1}
  #allocation0 [shape = 'u32[]', space=smem, size = 0x4, offset = 0x4, fixed_abs, tag = 'smem constant byte address 0x4 - core index']
  #allocation1 [shape = 'u32[72,128]{1,0:T(1,128)}', space=vmem, size = 0x9000, scoped, tag = 'internal scratch']
  %s0 = inlined_call_operand.vmem [shape: f32[2,32,256], index: 0, kind: input, shape index: {}]
  %s1 = inlined_call_operand.vmem [shape: f32[32,1], index: 1, kind: input, shape index: {}]
  %s2 = inlined_call_operand.vmem [shape: bf16[96,32], index: 2, kind: input, shape index: {}]
  %s3 = inlined_call_operand.vmem [shape: f32[96,1], index: 3, kind: input, shape index: {}]
  %s4 = inlined_call_operand.vmem [shape: bf16[32,32], index: 4, kind: input, shape index: {}]
  %s5 = inlined_call_operand.vmem [shape: f32[32,1], index: 5, kind: input, shape index: {}]
  %s6 = inlined_call_operand.hbm [shape: f32[2,32,256], index: 6, kind: output, shape index: {}]
  %s7 = sld [smem:[#allocation0]]
  $region57: #{tpu_custom_call.1} parent=0
    _
  %s9 = ssub.s32 1, %s7
  %s10 = scalar_select 0, %s9, %s7
  $region1: #{tpu_custom_call.1} parent=0
    #allocation2 [shape = 'u8[65536]{0}', space=vmem, size = 0x10000, scoped, tag = 'output window, operand 0']
    #allocation3 [shape = 's32[2]{0}', space=sflag, size = 0x8, scoped, tag = 'scoped memory for tpu_custom_call.1']
    %11 = vsyncpa [#allocation3], 0
    %s12 = scalar_lea.sflag [#allocation3], 1
    %13 = vsyncpa %s12, 0
    loop: start=0, step=1, limit=4
    $region2: #{tpu_custom_call.1} parent=1 // loop_pre_header
      _
    $region3: #{tpu_custom_call.1} parent=1 // loop_header
      %s15 = sphi 0, %s19
      %p16 = scmp.ge.s32.totalorder %s15, 4
      %s25 = sphi 0, %s27
      %s28 = sphi 0, %s25
      %s29 = sphi 0, %s28
      %s45 = sphi 0, %s29
      %s49 = sphi 0, %s49
      %s51 = sphi 0, %s49
      %s52 = sphi 0, %s51
      %s66 = sphi 0, %s52
      %s70 = sphi 0, %s70
      %s72 = sphi 0, %s70
      %s73 = sphi 0, %s72
      %s87 = sphi 0, %s73
      %s91 = sphi 0, %s91
      %s93 = sphi 0, %s91
      %s94 = sphi 0, %s93
      %s108 = sphi 0, %s94
      %s112 = sphi 0, %s112
      %s114 = sphi 0, %s112
      %s115 = sphi 0, %s114
      %s129 = sphi 0, %s115
      %s133 = sphi 0, %s133
      %s135 = sphi 0, %s133
      %s136 = sphi 0, %s135
      %s150 = sphi 0, %s136
      %s156 = sphi 0, %s158
      %s159 = sphi 0, %s156
      %s160 = sphi 0, %s159
      %s176 = sphi 0, %s160
    $region4: #{tpu_custom_call.1} parent=1 // loop_header_branch
      %18 = sbr.rel (%p16) target = $region8
    $region5: #{tpu_custom_call.1} parent=1 // loop_body
      %s20 = ssub.s32 %s15, 1
      %s21 = ssub.s32 %s15, 2
      %s22 = sadd.s32 %s15, 1
      %s23 = ssub.s32 %s15, %s22
      %p24 = scmp.eq.s32.totalorder %s23, 0
      %s26 = sadd.s32 %s25, 1
      %s27 = scalar_select %p24, %s25, %s26
      %p30 = pneg %p24
      %p31 = scmp.eq.s32.totalorder %s15, 1
      %p32 = por %p30, %p31
      %p33 = scmp.ne.s32.totalorder %s25, %s28
      %p34 = scmp.eq.s32.totalorder %s15, 0
      %p35 = por %p33, %p34
      %p36 = scmp.ne.s32.totalorder %s25, %s28
      %p37 = scmp.eq.s32.totalorder %s20, 1
      %p38 = por %p36, %p37
      %p39 = scmp.ne.s32.totalorder %s28, %s29
      %p40 = scmp.eq.s32.totalorder %s20, 0
      %p41 = por %p39, %p40
      %p42 = scmp.ne.s32.totalorder %s28, %s29
      %p43 = scmp.eq.s32.totalorder %s21, 1
      %p44 = por %p42, %p43
      %p46 = scmp.ne.s32.totalorder %s29, %s45
      %p47 = scmp.eq.s32.totalorder %s21, 0
      %p48 = por %p46, %p47
      %s50 = sadd.s32 %s49, 1
      %p53 = scmp.eq.s32.totalorder %s15, 1
      %p54 = scmp.ne.s32.totalorder %s49, %s51
      %p55 = scmp.eq.s32.totalorder %s15, 0
      %p56 = por %p54, %p55
      %p57 = scmp.ne.s32.totalorder %s49, %s51
      %p58 = scmp.eq.s32.totalorder %s20, 1
      %p59 = por %p57, %p58
      %p60 = scmp.ne.s32.totalorder %s51, %s52
      %p61 = scmp.eq.s32.totalorder %s20, 0
      %p62 = por %p60, %p61
      %p63 = scmp.ne.s32.totalorder %s51, %s52
      %p64 = scmp.eq.s32.totalorder %s21, 1
      %p65 = por %p63, %p64
      %p67 = scmp.ne.s32.totalorder %s52, %s66
      %p68 = scmp.eq.s32.totalorder %s21, 0
      %p69 = por %p67, %p68
      %s71 = sadd.s32 %s70, 1
      %p74 = scmp.eq.s32.totalorder %s15, 1
      %p75 = scmp.ne.s32.totalorder %s70, %s72
      %p76 = scmp.eq.s32.totalorder %s15, 0
      %p77 = por %p75, %p76
      %p78 = scmp.ne.s32.totalorder %s70, %s72
      %p79 = scmp.eq.s32.totalorder %s20, 1
      %p80 = por %p78, %p79
      %p81 = scmp.ne.s32.totalorder %s72, %s73
      %p82 = scmp.eq.s32.totalorder %s20, 0
      %p83 = por %p81, %p82
      %p84 = scmp.ne.s32.totalorder %s72, %s73
      %p85 = scmp.eq.s32.totalorder %s21, 1
      %p86 = por %p84, %p85
      %p88 = scmp.ne.s32.totalorder %s73, %s87
      %p89 = scmp.eq.s32.totalorder %s21, 0
      %p90 = por %p88, %p89
      %s92 = sadd.s32 %s91, 1
      %p95 = scmp.eq.s32.totalorder %s15, 1
      %p96 = scmp.ne.s32.totalorder %s91, %s93
      %p97 = scmp.eq.s32.totalorder %s15, 0
      %p98 = por %p96, %p97
      %p99 = scmp.ne.s32.totalorder %s91, %s93
      %p100 = scmp.eq.s32.totalorder %s20, 1
      %p101 = por %p99, %p100
      %p102 = scmp.ne.s32.totalorder %s93, %s94
      %p103 = scmp.eq.s32.totalorder %s20, 0
      %p104 = por %p102, %p103
      %p105 = scmp.ne.s32.totalorder %s93, %s94
      %p106 = scmp.eq.s32.totalorder %s21, 1
      %p107 = por %p105, %p106
      %p109 = scmp.ne.s32.totalorder %s94, %s108
      %p110 = scmp.eq.s32.totalorder %s21, 0
      %p111 = por %p109, %p110
      %s113 = sadd.s32 %s112, 1
      %p116 = scmp.eq.s32.totalorder %s15, 1
      %p117 = scmp.ne.s32.totalorder %s112, %s114
      %p118 = scmp.eq.s32.totalorder %s15, 0
      %p119 = por %p117, %p118
      %p120 = scmp.ne.s32.totalorder %s112, %s114
      %p121 = scmp.eq.s32.totalorder %s20, 1
      %p122 = por %p120, %p121
      %p123 = scmp.ne.s32.totalorder %s114, %s115
      %p124 = scmp.eq.s32.totalorder %s20, 0
      %p125 = por %p123, %p124
      %p126 = scmp.ne.s32.totalorder %s114, %s115
      %p127 = scmp.eq.s32.totalorder %s21, 1
      %p128 = por %p126, %p127
      %p130 = scmp.ne.s32.totalorder %s115, %s129
      %p131 = scmp.eq.s32.totalorder %s21, 0
      %p132 = por %p130, %p131
      %s134 = sadd.s32 %s133, 1
      %p137 = scmp.eq.s32.totalorder %s15, 1
      %p138 = scmp.ne.s32.totalorder %s133, %s135
      %p139 = scmp.eq.s32.totalorder %s15, 0
      %p140 = por %p138, %p139
      %p141 = scmp.ne.s32.totalorder %s133, %s135
      %p142 = scmp.eq.s32.totalorder %s20, 1
      %p143 = por %p141, %p142
      %p144 = scmp.ne.s32.totalorder %s135, %s136
      %p145 = scmp.eq.s32.totalorder %s20, 0
      %p146 = por %p144, %p145
      %p147 = scmp.ne.s32.totalorder %s135, %s136
      %p148 = scmp.eq.s32.totalorder %s21, 1
      %p149 = por %p147, %p148
      %p151 = scmp.ne.s32.totalorder %s136, %s150
      %p152 = scmp.eq.s32.totalorder %s21, 0
      %p153 = por %p151, %p152
      %s154 = ssub.s32 %s15, %s22
      %p155 = scmp.eq.s32.totalorder %s154, 0
      %s157 = sadd.s32 %s156, 1
      %s158 = scalar_select %p155, %s156, %s157
      %p161 = pneg %p155
      %p162 = scmp.eq.s32.totalorder %s15, 1
      %p163 = por %p161, %p162
      %p164 = scmp.ne.s32.totalorder %s156, %s159
      %p165 = scmp.eq.s32.totalorder %s15, 0
      %p166 = por %p164, %p165
      %p167 = scmp.ne.s32.totalorder %s156, %s159
      %p168 = scmp.eq.s32.totalorder %s20, 1
      %p169 = por %p167, %p168
      %p170 = scmp.ne.s32.totalorder %s159, %s160
      %p171 = scmp.eq.s32.totalorder %s20, 0
      %p172 = por %p170, %p171
      %p173 = scmp.ne.s32.totalorder %s159, %s160
      %p174 = scmp.eq.s32.totalorder %s21, 1
      %p175 = por %p173, %p174
      %p177 = scmp.ne.s32.totalorder %s160, %s176
      %p178 = scmp.eq.s32.totalorder %s21, 0
      %p179 = por %p177, %p178
      %p180 = scmp.le.s32.totalorder 1, %s15
      %p181 = scmp.lt.s32.totalorder %s15, 3
      %p182 = pnand %p180, %p181
      %p183 = pneg %p182
      // Predicated region
      $region9: #{tpu_custom_call.1} parent=5 // pred_check
        _
      $region10: #{tpu_custom_call.1} parent=5 // pred_check_branch
        %185 = sbr.rel (%p182) target = $region12
      $region11: #{tpu_custom_call.1} parent=5 // pred_region
        %s186 = ssub.s32 %s15, 1
        // Predicated region
        $region13: #{tpu_custom_call.1} parent=11 // pred_check
          %p187 = pneg %p62
        $region14: #{tpu_custom_call.1} parent=11 // pred_check_branch
          %189 = sbr.rel (%p187) target = $region16
        $region15: #{tpu_custom_call.1} parent=11 // pred_region
          _
        $region16: #{tpu_custom_call.1} parent=11 // pred_fallthru
          _
        // Predicated region
        $region17: #{tpu_custom_call.1} parent=11 // pred_check
          %p190 = pneg %p83
        $region18: #{tpu_custom_call.1} parent=11 // pred_check_branch
          %192 = sbr.rel (%p190) target = $region20
        $region19: #{tpu_custom_call.1} parent=11 // pred_region
          _
        $region20: #{tpu_custom_call.1} parent=11 // pred_fallthru
          _
        // Predicated region
        $region21: #{tpu_custom_call.1} parent=11 // pred_check
          %p193 = pneg %p104
        $region22: #{tpu_custom_call.1} parent=11 // pred_check_branch
          %195 = sbr.rel (%p193) target = $region24
        $region23: #{tpu_custom_call.1} parent=11 // pred_region
          _
        $region24: #{tpu_custom_call.1} parent=11 // pred_fallthru
          _
        // Predicated region
        $region25: #{tpu_custom_call.1} parent=11 // pred_check
          %p196 = pneg %p125
        $region26: #{tpu_custom_call.1} parent=11 // pred_check_branch
          %198 = sbr.rel (%p196) target = $region28
        $region27: #{tpu_custom_call.1} parent=11 // pred_region
          _
        $region28: #{tpu_custom_call.1} parent=11 // pred_fallthru
          _
        // Predicated region
        $region29: #{tpu_custom_call.1} parent=11 // pred_check
          %p199 = pneg %p146
        $region30: #{tpu_custom_call.1} parent=11 // pred_check_branch
          %201 = sbr.rel (%p199) target = $region32
        $region31: #{tpu_custom_call.1} parent=11 // pred_region
          _
        $region32: #{tpu_custom_call.1} parent=11 // pred_fallthru
          _
      $region12: #{tpu_custom_call.1} parent=5 // pred_fallthru
        _
      %p202 = scmp.lt.s32.totalorder %s15, 2
      // Predicated region
      $region33: #{tpu_custom_call.1} parent=5 // pred_check
        %p203 = pneg %p202
      $region34: #{tpu_custom_call.1} parent=5 // pred_check_branch
        %205 = sbr.rel (%p203) target = $region36
      $region35: #{tpu_custom_call.1} parent=5 // pred_region
        // Predicated region
        $region37: #{tpu_custom_call.1} parent=35 // pred_check
          %p206 = pneg %p35
        $region38: #{tpu_custom_call.1} parent=35 // pred_check_branch
          %208 = sbr.rel (%p206) target = $region40
        $region39: #{tpu_custom_call.1} parent=35 // pred_region
          %p209 = scmp.lt.s32.totalorder %s15, 1
          %s210 = scalar_select %p209, %s15, 1
          %s211 = smul.addr %s210, 8
          %s212 = smul.addr %s211, 8
          %s213 = scalar_lea.vmem %s0, %s212
        $region40: #{tpu_custom_call.1} parent=35 // pred_fallthru
          _
      $region36: #{tpu_custom_call.1} parent=5 // pred_fallthru
        _
      %p214 = scmp.le.s32.totalorder 1, %s15
      %p215 = scmp.lt.s32.totalorder %s15, 3
      %p216 = pnand %p214, %p215
      %p217 = pneg %p216
      // Predicated region
      $region41: #{tpu_custom_call.1} parent=5 // pred_check
        _
      $region42: #{tpu_custom_call.1} parent=5 // pred_check_branch
        %219 = sbr.rel (%p216) target = $region44
      $region43: #{tpu_custom_call.1} parent=5 // pred_region
        %s220 = ssub.s32 %s15, 1
        %p221 = scmp.lt.s32.totalorder %s20, 1
        %s222 = scalar_select %p221, %s20, 1
        %s223 = smul.addr %s222, 8
        %s224 = smul.addr %s223, 8
        %s225 = scalar_lea.vmem %s0, %s224
        %p226 = pneg %p41
        %p227 = pneg %p38
        %p228 = pneg %p62
        %p229 = pneg %p59
        %p230 = pneg %p83
        %p231 = pneg %p80
        %p232 = pneg %p104
        %p233 = pneg %p101
        %p234 = pneg %p125
        %p235 = pneg %p122
        %p236 = pneg %p146
        %p237 = pneg %p143
        %p238 = pneg %p172
        %p239 = pneg %p169
        %s240 = sand.u32 %s159, 1
        %s241 = scalar_lea.sflag [#allocation3], %s240
        %s242 = sand.u32 %s159, 1
        %s243 = smul.addr %s242, 64
        %s244 = scalar_lea.vmem [#allocation2], %s243
        %p245 = scmp.lt.s32.totalorder %s20, 1
        %s246 = scalar_select %p245, %s20, 1
        %s247 = smul.addr %s246, 8
        %s248 = smul.addr %s247, 8
        %s249 = scalar_lea.vmem %s0, %s248
        %v251 = vld [vmem:[%s1] sm:$0xff]
        %v252 = vld [vmem:[%s1 + $0x8] sm:$0xff]
        %v253 = vld [vmem:[%s1 + $0x10] sm:$0xff]
        %v254 = vld [vmem:[%s1 + $0x18] sm:$0xff]
        %v255 = vld [vmem:[%s2] sm:$0xf]
        %v256 = vld [vmem:[%s2 + $0x4] sm:$0xf]
        %v257 = vld [vmem:[%s2 + $0x8] sm:$0xf]
        %v258 = vld [vmem:[%s2 + $0xc] sm:$0xf]
        %v259 = vld [vmem:[%s2 + $0x10] sm:$0xf]
        %v260 = vld [vmem:[%s2 + $0x14] sm:$0xf]
        %v261 = vld [vmem:[%s2 + $0x18] sm:$0xf]
        %v262 = vld [vmem:[%s2 + $0x1c] sm:$0xf]
        %v263 = vld [vmem:[%s2 + $0x20] sm:$0xf]
        %v264 = vld [vmem:[%s2 + $0x24] sm:$0xf]
        %v265 = vld [vmem:[%s2 + $0x28] sm:$0xf]
        %v266 = vld [vmem:[%s2 + $0x2c] sm:$0xf]
        %v267 = vld [vmem:[%s3] sm:$0xff]
        %v268 = vld [vmem:[%s3 + $0x8] sm:$0xff]
        %v269 = vld [vmem:[%s3 + $0x10] sm:$0xff]
        %v270 = vld [vmem:[%s3 + $0x18] sm:$0xff]
        %v271 = vld [vmem:[%s3 + $0x20] sm:$0xff]
        %v272 = vld [vmem:[%s3 + $0x28] sm:$0xff]
        %v273 = vld [vmem:[%s3 + $0x30] sm:$0xff]
        %v274 = vld [vmem:[%s3 + $0x38] sm:$0xff]
        %v275 = vld [vmem:[%s3 + $0x40] sm:$0xff]
        %v276 = vld [vmem:[%s3 + $0x48] sm:$0xff]
        %v277 = vld [vmem:[%s3 + $0x50] sm:$0xff]
        %v278 = vld [vmem:[%s3 + $0x58] sm:$0xff]
        %v279 = vld [vmem:[%s4] sm:$0xf]
        %v280 = vld [vmem:[%s4 + $0x4] sm:$0xf]
        %v281 = vld [vmem:[%s4 + $0x8] sm:$0xf]
        %v282 = vld [vmem:[%s4 + $0xc] sm:$0xf]
        %v283 = vld [vmem:[%s5] sm:$0xff]
        %v284 = vld [vmem:[%s5 + $0x8] sm:$0xff]
        %v285 = vld [vmem:[%s5 + $0x10] sm:$0xff]
        %v286 = vld [vmem:[%s5 + $0x18] sm:$0xff]
        %v287 = vld [vmem:[%s249] sm:$0xff]
        %v288 = vld [vmem:[%s249 + $0x8] sm:$0xff]
        %v289 = vld [vmem:[%s249 + $0x10] sm:$0xff]
        %v290 = vld [vmem:[%s249 + $0x18] sm:$0xff]
        %v291 = vld [vmem:[%s249 + $0x20] sm:$0xff]
        %v292 = vld [vmem:[%s249 + $0x28] sm:$0xff]
        %v293 = vld [vmem:[%s249 + $0x30] sm:$0xff]
        %v294 = vld [vmem:[%s249 + $0x38] sm:$0xff]
        %v295 = vmul.f32 %v287, %v287
        %v296 = vmul.f32 %v288, %v288
        %v297 = vmul.f32 %v289, %v289
        %v298 = vmul.f32 %v290, %v290
        %v299 = vmul.f32 %v291, %v291
        %v300 = vmul.f32 %v292, %v292
        %v301 = vmul.f32 %v293, %v293
        %v302 = vmul.f32 %v294, %v294
        %v303 = vadd.f32 %v295, %v297
        %v304 = vadd.f32 %v303, %v299
        %v305 = vadd.f32 %v304, %v301
        %v306 = vrot.slane %v305, 4
        %v307 = vadd.f32 %v305, %v306
        %v308 = vrot.slane %v307, 2
        %v309 = vadd.f32 %v307, %v308
        %v310 = vrot.slane %v309, 1
        %v311 = vadd.f32 %v309, %v310
        %v312 = vadd.f32 %v296, %v298
        %v313 = vadd.f32 %v312, %v300
        %v314 = vadd.f32 %v313, %v302
        %v315 = vrot.slane %v314, 4
        %v316 = vadd.f32 %v314, %v315
        %v317 = vrot.slane %v316, 2
        %v318 = vadd.f32 %v316, %v317
        %v319 = vrot.slane %v318, 1
        %v320 = vadd.f32 %v318, %v319
        %v321 = vmax.f32 %v311, 1e-24
        %v322 = vmax.f32 %v320, 1e-24
        %v323 = vrsqrt.pop %v321
        %v324 = vmul.f32 %v323, %v321
        %v325 = vmul.f32 %v324, %v323
        %v326 = vmul.f32 0.5, %v325
        %v327 = vsub.f32 1.5, %v326
        %v328 = vmul.f32 %v323, %v327
        %vm329 = vweird.f32 %v321
        %vm330 = vweird.f32 %v323
        %vm331 = vmor %vm329, %vm330
        %v332 = vsel %vm331, %v323, %v328
        %v333 = vrsqrt.pop %v322
        %v334 = vmul.f32 %v333, %v322
        %v335 = vmul.f32 %v334, %v333
        %v336 = vmul.f32 0.5, %v335
        %v337 = vsub.f32 1.5, %v336
        %v338 = vmul.f32 %v333, %v337
        %vm339 = vweird.f32 %v322
        %vm340 = vweird.f32 %v333
        %vm341 = vmor %vm339, %vm340
        %v342 = vsel %vm341, %v333, %v338
        %v343 = vmul.f32 %v287, %v332
        %v344 = vmul.f32 %v288, %v342
        %v345 = vmul.f32 %v289, %v332
        %v346 = vmul.f32 %v290, %v342
        %v347 = vmul.f32 %v291, %v332
        %v348 = vmul.f32 %v292, %v342
        %v349 = vmul.f32 %v293, %v332
        %v350 = vmul.f32 %v294, %v342
        %352 = vset.pattern.permute.xlu0 0
        %353 = vperm.xlu0 %352, %v251
        %v354 = vpop.permute.xlu0 %353
        %357 = vset.pattern.permute.xlu0 0
        %358 = vperm.xlu0 %357, %v252
        %v359 = vpop.permute.xlu0 %358
        %362 = vset.pattern.permute.xlu0 0
        %363 = vperm.xlu0 %362, %v253
        %v364 = vpop.permute.xlu0 %363
        %367 = vset.pattern.permute.xlu0 0
        %368 = vperm.xlu0 %367, %v254
        %v369 = vpop.permute.xlu0 %368
        %v371 = vmul.f32 %v343, %v354
        %v372 = vmul.f32 %v344, %v354
        %v373 = vmul.f32 %v345, %v359
        %v374 = vmul.f32 %v346, %v359
        %v375 = vmul.f32 %v347, %v364
        %v376 = vmul.f32 %v348, %v364
        %v377 = vmul.f32 %v349, %v369
        %v378 = vmul.f32 %v350, %v369
        %v379 = vpack.c.bf16 %v373, %v371
        %v380 = vpack.c.bf16 %v374, %v372
        %v381 = vpack.c.bf16 %v377, %v375
        %v382 = vpack.c.bf16 %v378, %v376
        %384 = vset.pattern.permute.xlu0 0
        %385 = vperm.xlu0 %384, %v267
        %v386 = vpop.permute.xlu0 %385
        %389 = vset.pattern.permute.xlu0 0
        %390 = vperm.xlu0 %389, %v268
        %v391 = vpop.permute.xlu0 %390
        %394 = vset.pattern.permute.xlu0 0
        %395 = vperm.xlu0 %394, %v269
        %v396 = vpop.permute.xlu0 %395
        %399 = vset.pattern.permute.xlu0 0
        %400 = vperm.xlu0 %399, %v270
        %v401 = vpop.permute.xlu0 %400
        %404 = vset.pattern.permute.xlu0 0
        %405 = vperm.xlu0 %404, %v271
        %v406 = vpop.permute.xlu0 %405
        %409 = vset.pattern.permute.xlu0 0
        %410 = vperm.xlu0 %409, %v272
        %v411 = vpop.permute.xlu0 %410
        %414 = vset.pattern.permute.xlu0 0
        %415 = vperm.xlu0 %414, %v273
        %v416 = vpop.permute.xlu0 %415
        %419 = vset.pattern.permute.xlu0 0
        %420 = vperm.xlu0 %419, %v274
        %v421 = vpop.permute.xlu0 %420
        %424 = vset.pattern.permute.xlu0 0
        %425 = vperm.xlu0 %424, %v275
        %v426 = vpop.permute.xlu0 %425
        %429 = vset.pattern.permute.xlu0 0
        %430 = vperm.xlu0 %429, %v276
        %v431 = vpop.permute.xlu0 %430
        %434 = vset.pattern.permute.xlu0 0
        %435 = vperm.xlu0 %434, %v277
        %v436 = vpop.permute.xlu0 %435
        %439 = vset.pattern.permute.xlu0 0
        %440 = vperm.xlu0 %439, %v278
        %v441 = vpop.permute.xlu0 %440
        %v455 = vunpack.c.l.b16 %v255
        %v456 = vunpack.c.l.b16 %v256
        %v457 = vunpack.c.l.b16 %v257
        %v458 = vunpack.c.l.b16 %v258
        %v459 = vunpack.c.l.b16 %v259
        %v460 = vunpack.c.l.b16 %v260
        %v461 = vunpack.c.l.b16 %v261
        %v462 = vunpack.c.l.b16 %v262
        %v463 = vunpack.c.l.b16 %v263
        %v464 = vunpack.c.l.b16 %v264
        %v465 = vunpack.c.l.b16 %v265
        %v466 = vunpack.c.l.b16 %v266
        %v467 = vpack.c.b16 %v456, %v455
        %v468 = vpack.c.b16 %v458, %v457
        %v469 = vpack.c.b16 %v460, %v459
        %v470 = vpack.c.b16 %v462, %v461
        %v471 = vpack.c.b16 %v464, %v463
        %v472 = vpack.c.b16 %v466, %v465
        %vm473 = vcmask 261120
        %v475 = vsel %vm473, %v467, 0
        %v478 = vsel %vm473, %v468, 0
        %v481 = vsel %vm473, %v469, 0
        %v484 = vsel %vm473, %v470, 0
        %v487 = vsel %vm473, %v471, 0
        %v490 = vsel %vm473, %v472, 0
        %492 = vmatpush.bf16.msra.mxu0 0
        %493 = vmatpush.bf16.msra.mxu0 0
        %494 = vmatpush.bf16.msra.mxu0 0
        %495 = vmatpush.bf16.msra.mxu0 0
        %496 = vmatpush.bf16.msra.mxu0 0
        %497 = vmatpush.bf16.msra.mxu0 0
        %498 = vmatpush.bf16.msra.mxu0 %v381
        %499 = vmatpush.bf16.msra.mxu0 %v379
        %500 = vmatmul.bf16.gmra.mxu0 %v475
        %v501 = vpop.f32.mrf.mxu0
        %v502 = vadd.f32 %v386, %v501
        %v503 = vpop.f32.mrf.mxu0
        %v504 = vadd.f32 %v391, %v503
        %505 = vmatmul.bf16.gmra.mxu0 %v478
        %v506 = vpop.f32.mrf.mxu0
        %v507 = vadd.f32 %v396, %v506
        %v508 = vpop.f32.mrf.mxu0
        %v509 = vadd.f32 %v401, %v508
        %510 = vmatmul.bf16.gmra.mxu0 %v481
        %v511 = vpop.f32.mrf.mxu0
        %v512 = vadd.f32 %v406, %v511
        %v513 = vpop.f32.mrf.mxu0
        %v514 = vadd.f32 %v411, %v513
        %515 = vmatmul.bf16.gmra.mxu0 %v484
        %v516 = vpop.f32.mrf.mxu0
        %v517 = vadd.f32 %v416, %v516
        %v518 = vpop.f32.mrf.mxu0
        %v519 = vadd.f32 %v421, %v518
        %520 = vmatmul.bf16.gmra.mxu0 %v487
        %v521 = vpop.f32.mrf.mxu0
        %v522 = vadd.f32 %v426, %v521
        %v523 = vpop.f32.mrf.mxu0
        %v524 = vadd.f32 %v431, %v523
        %525 = vmatmul.bf16.gmra.mxu0 %v490
        %v526 = vpop.f32.mrf.mxu0
        %v527 = vadd.f32 %v436, %v526
        %v528 = vpop.f32.mrf.mxu0
        %v529 = vadd.f32 %v441, %v528
        %530 = vdwg.mxu0
        %531 = vmatpush.bf16.msra.mxu0 0
        %532 = vmatpush.bf16.msra.mxu0 0
        %533 = vmatpush.bf16.msra.mxu0 0
        %534 = vmatpush.bf16.msra.mxu0 0
        %535 = vmatpush.bf16.msra.mxu0 0
        %536 = vmatpush.bf16.msra.mxu0 0
        %537 = vmatpush.bf16.msra.mxu0 %v382
        %538 = vmatpush.bf16.msra.mxu0 %v380
        %539 = vmatmul.bf16.gmra.mxu0 %v475
        %v540 = vpop.f32.mrf.mxu0
        %v541 = vadd.f32 %v386, %v540
        %v542 = vpop.f32.mrf.mxu0
        %v543 = vadd.f32 %v391, %v542
        %544 = vmatmul.bf16.gmra.mxu0 %v478
        %v545 = vpop.f32.mrf.mxu0
        %v546 = vadd.f32 %v396, %v545
        %v547 = vpop.f32.mrf.mxu0
        %v548 = vadd.f32 %v401, %v547
        %549 = vmatmul.bf16.gmra.mxu0 %v481
        %v550 = vpop.f32.mrf.mxu0
        %v551 = vadd.f32 %v406, %v550
        %v552 = vpop.f32.mrf.mxu0
        %v553 = vadd.f32 %v411, %v552
        %554 = vmatmul.bf16.gmra.mxu0 %v484
        %v555 = vpop.f32.mrf.mxu0
        %v556 = vadd.f32 %v416, %v555
        %v557 = vpop.f32.mrf.mxu0
        %v558 = vadd.f32 %v421, %v557
        %559 = vmatmul.bf16.gmra.mxu0 %v487
        %v560 = vpop.f32.mrf.mxu0
        %v561 = vadd.f32 %v426, %v560
        %v562 = vpop.f32.mrf.mxu0
        %v563 = vadd.f32 %v431, %v562
        %564 = vmatmul.bf16.gmra.mxu0 %v490
        %v565 = vpop.f32.mrf.mxu0
        %v566 = vadd.f32 %v436, %v565
        %v567 = vpop.f32.mrf.mxu0
        %v568 = vadd.f32 %v441, %v567
        %569 = vdwg.mxu0
        %570 = vxpose.xlu0.b32.start [1/16] %v502, 128
        %571 = vxpose.xlu0.b32.cont [2/16] %v504, 128
        %572 = vxpose.xlu0.b32.cont [3/16] %v507, 128
        %573 = vxpose.xlu0.b32.cont [4/16] %v509, 128
        %574 = vxpose.xlu0.b32.cont [5/16] 0.0, 128
        %575 = vxpose.xlu0.b32.cont [6/16] 0.0, 128
        %576 = vxpose.xlu0.b32.cont [7/16] 0.0, 128
        %577 = vxpose.xlu0.b32.cont [8/16] 0.0, 128
        %578 = vxpose.xlu0.b32.cont [9/16] 0.0, 128
        %579 = vxpose.xlu0.b32.cont [10/16] 0.0, 128
        %580 = vxpose.xlu0.b32.cont [11/16] 0.0, 128
        %581 = vxpose.xlu0.b32.cont [12/16] 0.0, 128
        %582 = vxpose.xlu0.b32.cont [13/16] 0.0, 128
        %583 = vxpose.xlu0.b32.cont [14/16] 0.0, 128
        %584 = vxpose.xlu0.b32.cont [15/16] 0.0, 128
        %585 = vxpose.xlu0.b32.end [16/16] 0.0, 128
        %v586 = vpop.trf.xlu0
        %v587 = vpop.trf.xlu0
        %v588 = vpop.trf.xlu0
        %v589 = vpop.trf.xlu0
        %v590 = vpop.trf.xlu0
        %v591 = vpop.trf.xlu0
        %v592 = vpop.trf.xlu0
        %v593 = vpop.trf.xlu0
        %v594 = vpop.trf.xlu0
        %v595 = vpop.trf.xlu0
        %v596 = vpop.trf.xlu0
        %v597 = vpop.trf.xlu0
        %v598 = vpop.trf.xlu0
        %v599 = vpop.trf.xlu0
        %v600 = vpop.trf.xlu0
        %v601 = vpop.trf.xlu0
        %v602 = vpack.c.bf16 %v587, %v586
        %v603 = vpack.c.bf16 %v589, %v588
        %v604 = vpack.c.bf16 %v591, %v590
        %v605 = vpack.c.bf16 %v593, %v592
        %v606 = vpack.c.bf16 %v514, %v512
        %v607 = vpack.c.bf16 %v519, %v517
        %v609 = vsel %vm473, %v602, 0
        %v612 = vsel %vm473, %v603, 0
        %v615 = vsel %vm473, %v604, 0
        %v618 = vsel %vm473, %v605, 0
        %620 = vmatpush.bf16.msra.mxu0 0
        %621 = vmatpush.bf16.msra.mxu0 0
        %622 = vmatpush.bf16.msra.mxu0 0
        %623 = vmatpush.bf16.msra.mxu0 0
        %624 = vmatpush.bf16.msra.mxu0 0
        %625 = vmatpush.bf16.msra.mxu0 0
        %626 = vmatpush.bf16.msra.mxu0 %v607
        %627 = vmatpush.bf16.msra.mxu0 %v606
        %628 = vmatmul.bf16.gmra.mxu0 %v609
        %v629 = vpop.f32.mrf.mxu0
        %v630 = vadd.f32 0.0, %v629
        %v631 = vpop.f32.mrf.mxu0
        %v632 = vadd.f32 0.0, %v631
        %633 = vmatmul.bf16.gmra.mxu0 %v612
        %v634 = vpop.f32.mrf.mxu0
        %v635 = vadd.f32 0.0, %v634
        %v636 = vpop.f32.mrf.mxu0
        %v637 = vadd.f32 0.0, %v636
        %638 = vmatmul.bf16.gmra.mxu0 %v615
        %v639 = vpop.f32.mrf.mxu0
        %v640 = vadd.f32 0.0, %v639
        %v641 = vpop.f32.mrf.mxu0
        %v642 = vadd.f32 0.0, %v641
        %643 = vmatmul.bf16.gmra.mxu0 %v618
        %v644 = vpop.f32.mrf.mxu0
        %v645 = vadd.f32 0.0, %v644
        %v646 = vpop.f32.mrf.mxu0
        %v647 = vadd.f32 0.0, %v646
        %648 = vdwg.mxu0
        %vm649 = vcmask 523264
        %v650 = vsel %vm649, %v630, -inf
        %651 = vmax.xlane.f32.xlu0 %v650
        %v652 = vpop.xlane.xlu0 %651
        %v653 = vsel %vm649, %v632, -inf
        %654 = vmax.xlane.f32.xlu0 %v653
        %v655 = vpop.xlane.xlu0 %654
        %v656 = vsel %vm649, %v635, -inf
        %657 = vmax.xlane.f32.xlu0 %v656
        %v658 = vpop.xlane.xlu0 %657
        %v659 = vsel %vm649, %v637, -inf
        %660 = vmax.xlane.f32.xlu0 %v659
        %v661 = vpop.xlane.xlu0 %660
        %v662 = vsel %vm649, %v640, -inf
        %663 = vmax.xlane.f32.xlu0 %v662
        %v664 = vpop.xlane.xlu0 %663
        %v665 = vsel %vm649, %v642, -inf
        %666 = vmax.xlane.f32.xlu0 %v665
        %v667 = vpop.xlane.xlu0 %666
        %v668 = vsel %vm649, %v645, -inf
        %669 = vmax.xlane.f32.xlu0 %v668
        %v670 = vpop.xlane.xlu0 %669
        %v671 = vsel %vm649, %v647, -inf
        %672 = vmax.xlane.f32.xlu0 %v671
        %v673 = vpop.xlane.xlu0 %672
        %v674 = vsub.f32 %v630, %v652
        %v675 = vsub.f32 %v632, %v655
        %v676 = vsub.f32 %v635, %v658
        %v677 = vsub.f32 %v637, %v661
        %v678 = vsub.f32 %v640, %v664
        %v679 = vsub.f32 %v642, %v667
        %v680 = vsub.f32 %v645, %v670
        %v681 = vsub.f32 %v647, %v673
        %v682 = vmul.f32 %v674, 1.442695
        %v683 = vpow.pop %v682
        %v684 = vmul.f32 %v675, 1.442695
        %v685 = vpow.pop %v684
        %v686 = vmul.f32 %v676, 1.442695
        %v687 = vpow.pop %v686
        %v688 = vmul.f32 %v677, 1.442695
        %v689 = vpow.pop %v688
        %v690 = vmul.f32 %v678, 1.442695
        %v691 = vpow.pop %v690
        %v692 = vmul.f32 %v679, 1.442695
        %v693 = vpow.pop %v692
        %v694 = vmul.f32 %v680, 1.442695
        %v695 = vpow.pop %v694
        %v696 = vmul.f32 %v681, 1.442695
        %v697 = vpow.pop %v696
        %v698 = vsel %vm649, %v683, 0.0
        %699 = vadd.xlane.f32.xlu0 %v698
        %v700 = vpop.xlane.xlu0 %699
        %v701 = vsel %vm649, %v685, 0.0
        %702 = vadd.xlane.f32.xlu0 %v701
        %v703 = vpop.xlane.xlu0 %702
        %v704 = vsel %vm649, %v687, 0.0
        %705 = vadd.xlane.f32.xlu0 %v704
        %v706 = vpop.xlane.xlu0 %705
        %v707 = vsel %vm649, %v689, 0.0
        %708 = vadd.xlane.f32.xlu0 %v707
        %v709 = vpop.xlane.xlu0 %708
        %v710 = vsel %vm649, %v691, 0.0
        %711 = vadd.xlane.f32.xlu0 %v710
        %v712 = vpop.xlane.xlu0 %711
        %v713 = vsel %vm649, %v693, 0.0
        %714 = vadd.xlane.f32.xlu0 %v713
        %v715 = vpop.xlane.xlu0 %714
        %v716 = vsel %vm649, %v695, 0.0
        %717 = vadd.xlane.f32.xlu0 %v716
        %v718 = vpop.xlane.xlu0 %717
        %v719 = vsel %vm649, %v697, 0.0
        %720 = vadd.xlane.f32.xlu0 %v719
        %v721 = vpop.xlane.xlu0 %720
        %v722 = vrcp.pop %v700
        %v723 = vrcp.pop %v703
        %v724 = vrcp.pop %v706
        %v725 = vrcp.pop %v709
        %v726 = vrcp.pop %v712
        %v727 = vrcp.pop %v715
        %v728 = vrcp.pop %v718
        %v729 = vrcp.pop %v721
        %v730 = vmul.f32 %v683, %v722
        %v731 = vmul.f32 %v685, %v723
        %v732 = vmul.f32 %v687, %v724
        %v733 = vmul.f32 %v689, %v725
        %v734 = vmul.f32 %v691, %v726
        %v735 = vmul.f32 %v693, %v727
        %v736 = vmul.f32 %v695, %v728
        %v737 = vmul.f32 %v697, %v729
        %v738 = vpack.c.bf16 %v524, %v522
        %v739 = vpack.c.bf16 %v529, %v527
        %v740 = vpack.c.bf16 %v731, %v730
        %v741 = vpack.c.bf16 %v733, %v732
        %v742 = vpack.c.bf16 %v735, %v734
        %v743 = vpack.c.bf16 %v737, %v736
        %v745 = vsel %vm649, %v738, 0
        %v748 = vsel %vm649, %v739, 0
        %v751 = vsel %vm649, %v740, 0
        %v754 = vsel %vm649, %v741, 0
        %v757 = vsel %vm649, %v742, 0
        %v760 = vsel %vm649, %v743, 0
        %762 = vmatpush.bf16.xpose.msra.mxu0 0
        %763 = vmatpush.bf16.xpose.msra.mxu0 0
        %764 = vmatpush.bf16.xpose.msra.mxu0 0
        %765 = vmatpush.bf16.xpose.msra.mxu0 0
        %766 = vmatpush.bf16.xpose.msra.mxu0 %v760
        %767 = vmatpush.bf16.xpose.msra.mxu0 %v757
        %768 = vmatpush.bf16.xpose.msra.mxu0 %v754
        %769 = vmatpush.bf16.xpose.msra.mxu0 %v751
        %770 = vmatmul.bf16.gmra.mxu0 %v745
        %v771 = vpop.f32.mrf.mxu0
        %v772 = vadd.f32 0.0, %v771
        %v773 = vpop.f32.mrf.mxu0
        %v774 = vadd.f32 0.0, %v773
        %775 = vmatmul.bf16.gmra.mxu0 %v748
        %v776 = vpop.f32.mrf.mxu0
        %v777 = vadd.f32 0.0, %v776
        %v778 = vpop.f32.mrf.mxu0
        %v779 = vadd.f32 0.0, %v778
        %780 = vdwg.mxu0
        %v781 = vpack.c.bf16 %v772, %v772
        %v782 = vpack.c.bf16 %v774, %v774
        %v783 = vpack.c.bf16 %v777, %v777
        %v784 = vpack.c.bf16 %v779, %v779
        %789 = vrot.lane.b32.xlu0 %v502, 64
        %v790 = vpop.permute.xlu0 %789
        %791 = vrot.lane.b32.xlu0 %v504, 64
        %v792 = vpop.permute.xlu0 %791
        %793 = vrot.lane.b32.xlu0 %v507, 64
        %v794 = vpop.permute.xlu0 %793
        %795 = vrot.lane.b32.xlu0 %v509, 64
        %v796 = vpop.permute.xlu0 %795
        %801 = vxpose.xlu0.b32.start [1/16] %v790, 128
        %802 = vxpose.xlu0.b32.cont [2/16] %v792, 128
        %803 = vxpose.xlu0.b32.cont [3/16] %v794, 128
        %804 = vxpose.xlu0.b32.cont [4/16] %v796, 128
        %805 = vxpose.xlu0.b32.cont [5/16] 0.0, 128
        %806 = vxpose.xlu0.b32.cont [6/16] 0.0, 128
        %807 = vxpose.xlu0.b32.cont [7/16] 0.0, 128
        %808 = vxpose.xlu0.b32.cont [8/16] 0.0, 128
        %809 = vxpose.xlu0.b32.cont [9/16] 0.0, 128
        %810 = vxpose.xlu0.b32.cont [10/16] 0.0, 128
        %811 = vxpose.xlu0.b32.cont [11/16] 0.0, 128
        %812 = vxpose.xlu0.b32.cont [12/16] 0.0, 128
        %813 = vxpose.xlu0.b32.cont [13/16] 0.0, 128
        %814 = vxpose.xlu0.b32.cont [14/16] 0.0, 128
        %815 = vxpose.xlu0.b32.cont [15/16] 0.0, 128
        %816 = vxpose.xlu0.b32.end [16/16] 0.0, 128
        %v817 = vpop.trf.xlu0
        %v818 = vpop.trf.xlu0
        %v819 = vpop.trf.xlu0
        %v820 = vpop.trf.xlu0
        %v821 = vpop.trf.xlu0
        %v822 = vpop.trf.xlu0
        %v823 = vpop.trf.xlu0
        %v824 = vpop.trf.xlu0
        %v825 = vpop.trf.xlu0
        %v826 = vpop.trf.xlu0
        %v827 = vpop.trf.xlu0
        %v828 = vpop.trf.xlu0
        %v829 = vpop.trf.xlu0
        %v830 = vpop.trf.xlu0
        %v831 = vpop.trf.xlu0
        %v832 = vpop.trf.xlu0
        %v833 = vpack.c.bf16 %v818, %v817
        %v834 = vpack.c.bf16 %v820, %v819
        %v835 = vpack.c.bf16 %v822, %v821
        %v836 = vpack.c.bf16 %v824, %v823
        %839 = vrot.lane.b32.xlu0 %v606, 64
        %v840 = vpop.permute.xlu0 %839
        %841 = vrot.lane.b32.xlu0 %v607, 64
        %v842 = vpop.permute.xlu0 %841
        %v846 = vsel %vm473, %v833, 0
        %v849 = vsel %vm473, %v834, 0
        %v852 = vsel %vm473, %v835, 0
        %v855 = vsel %vm473, %v836, 0
        %857 = vmatpush.bf16.msra.mxu0 0
        %858 = vmatpush.bf16.msra.mxu0 0
        %859 = vmatpush.bf16.msra.mxu0 0
        %860 = vmatpush.bf16.msra.mxu0 0
        %861 = vmatpush.bf16.msra.mxu0 0
        %862 = vmatpush.bf16.msra.mxu0 0
        %863 = vmatpush.bf16.msra.mxu0 %v842
        %864 = vmatpush.bf16.msra.mxu0 %v840
        %865 = vmatmul.bf16.gmra.mxu0 %v846
        %v866 = vpop.f32.mrf.mxu0
        %v867 = vadd.f32 0.0, %v866
        %v868 = vpop.f32.mrf.mxu0
        %v869 = vadd.f32 0.0, %v868
        %870 = vmatmul.bf16.gmra.mxu0 %v849
        %v871 = vpop.f32.mrf.mxu0
        %v872 = vadd.f32 0.0, %v871
        %v873 = vpop.f32.mrf.mxu0
        %v874 = vadd.f32 0.0, %v873
        %875 = vmatmul.bf16.gmra.mxu0 %v852
        %v876 = vpop.f32.mrf.mxu0
        %v877 = vadd.f32 0.0, %v876
        %v878 = vpop.f32.mrf.mxu0
        %v879 = vadd.f32 0.0, %v878
        %880 = vmatmul.bf16.gmra.mxu0 %v855
        %v881 = vpop.f32.mrf.mxu0
        %v882 = vadd.f32 0.0, %v881
        %v883 = vpop.f32.mrf.mxu0
        %v884 = vadd.f32 0.0, %v883
        %885 = vdwg.mxu0
        %v886 = vsel %vm649, %v867, -inf
        %887 = vmax.xlane.f32.xlu0 %v886
        %v888 = vpop.xlane.xlu0 %887
        %v889 = vsel %vm649, %v869, -inf
        %890 = vmax.xlane.f32.xlu0 %v889
        %v891 = vpop.xlane.xlu0 %890
        %v892 = vsel %vm649, %v872, -inf
        %893 = vmax.xlane.f32.xlu0 %v892
        %v894 = vpop.xlane.xlu0 %893
        %v895 = vsel %vm649, %v874, -inf
        %896 = vmax.xlane.f32.xlu0 %v895
        %v897 = vpop.xlane.xlu0 %896
        %v898 = vsel %vm649, %v877, -inf
        %899 = vmax.xlane.f32.xlu0 %v898
        %v900 = vpop.xlane.xlu0 %899
        %v901 = vsel %vm649, %v879, -inf
        %902 = vmax.xlane.f32.xlu0 %v901
        %v903 = vpop.xlane.xlu0 %902
        %v904 = vsel %vm649, %v882, -inf
        %905 = vmax.xlane.f32.xlu0 %v904
        %v906 = vpop.xlane.xlu0 %905
        %v907 = vsel %vm649, %v884, -inf
        %908 = vmax.xlane.f32.xlu0 %v907
        %v909 = vpop.xlane.xlu0 %908
        %v910 = vsub.f32 %v867, %v888
        %v911 = vsub.f32 %v869, %v891
        %v912 = vsub.f32 %v872, %v894
        %v913 = vsub.f32 %v874, %v897
        %v914 = vsub.f32 %v877, %v900
        %v915 = vsub.f32 %v879, %v903
        %v916 = vsub.f32 %v882, %v906
        %v917 = vsub.f32 %v884, %v909
        %v918 = vmul.f32 %v910, 1.442695
        %v919 = vpow.pop %v918
        %v920 = vmul.f32 %v911, 1.442695
        %v921 = vpow.pop %v920
        %v922 = vmul.f32 %v912, 1.442695
        %v923 = vpow.pop %v922
        %v924 = vmul.f32 %v913, 1.442695
        %v925 = vpow.pop %v924
        %v926 = vmul.f32 %v914, 1.442695
        %v927 = vpow.pop %v926
        %v928 = vmul.f32 %v915, 1.442695
        %v929 = vpow.pop %v928
        %v930 = vmul.f32 %v916, 1.442695
        %v931 = vpow.pop %v930
        %v932 = vmul.f32 %v917, 1.442695
        %v933 = vpow.pop %v932
        %v934 = vsel %vm649, %v919, 0.0
        %935 = vadd.xlane.f32.xlu0 %v934
        %v936 = vpop.xlane.xlu0 %935
        %v937 = vsel %vm649, %v921, 0.0
        %938 = vadd.xlane.f32.xlu0 %v937
        %v939 = vpop.xlane.xlu0 %938
        %v940 = vsel %vm649, %v923, 0.0
        %941 = vadd.xlane.f32.xlu0 %v940
        %v942 = vpop.xlane.xlu0 %941
        %v943 = vsel %vm649, %v925, 0.0
        %944 = vadd.xlane.f32.xlu0 %v943
        %v945 = vpop.xlane.xlu0 %944
        %v946 = vsel %vm649, %v927, 0.0
        %947 = vadd.xlane.f32.xlu0 %v946
        %v948 = vpop.xlane.xlu0 %947
        %v949 = vsel %vm649, %v929, 0.0
        %950 = vadd.xlane.f32.xlu0 %v949
        %v951 = vpop.xlane.xlu0 %950
        %v952 = vsel %vm649, %v931, 0.0
        %953 = vadd.xlane.f32.xlu0 %v952
        %v954 = vpop.xlane.xlu0 %953
        %v955 = vsel %vm649, %v933, 0.0
        %956 = vadd.xlane.f32.xlu0 %v955
        %v957 = vpop.xlane.xlu0 %956
        %v958 = vrcp.pop %v936
        %v959 = vrcp.pop %v939
        %v960 = vrcp.pop %v942
        %v961 = vrcp.pop %v945
        %v962 = vrcp.pop %v948
        %v963 = vrcp.pop %v951
        %v964 = vrcp.pop %v954
        %v965 = vrcp.pop %v957
        %v966 = vmul.f32 %v919, %v958
        %v967 = vmul.f32 %v921, %v959
        %v968 = vmul.f32 %v923, %v960
        %v969 = vmul.f32 %v925, %v961
        %v970 = vmul.f32 %v927, %v962
        %v971 = vmul.f32 %v929, %v963
        %v972 = vmul.f32 %v931, %v964
        %v973 = vmul.f32 %v933, %v965
        %v974 = vpack.c.bf16 %v967, %v966
        %v975 = vpack.c.bf16 %v969, %v968
        %v976 = vpack.c.bf16 %v971, %v970
        %v977 = vpack.c.bf16 %v973, %v972
        %980 = vrot.lane.b32.xlu0 %v738, 64
        %v981 = vpop.permute.xlu0 %980
        %982 = vrot.lane.b32.xlu0 %v739, 64
        %v983 = vpop.permute.xlu0 %982
        %v985 = vsel %vm649, %v981, 0
        %v988 = vsel %vm649, %v983, 0
        %v991 = vsel %vm649, %v974, 0
        %v994 = vsel %vm649, %v975, 0
        %v997 = vsel %vm649, %v976, 0
        %v1000 = vsel %vm649, %v977, 0
        %1002 = vmatpush.bf16.xpose.msra.mxu0 0
        %1003 = vmatpush.bf16.xpose.msra.mxu0 0
        %1004 = vmatpush.bf16.xpose.msra.mxu0 0
        %1005 = vmatpush.bf16.xpose.msra.mxu0 0
        %1006 = vmatpush.bf16.xpose.msra.mxu0 %v1000
        %1007 = vmatpush.bf16.xpose.msra.mxu0 %v997
        %1008 = vmatpush.bf16.xpose.msra.mxu0 %v994
        %1009 = vmatpush.bf16.xpose.msra.mxu0 %v991
        %1010 = vmatmul.bf16.gmra.mxu0 %v985
        %v1011 = vpop.f32.mrf.mxu0
        %v1012 = vadd.f32 0.0, %v1011
        %v1013 = vpop.f32.mrf.mxu0
        %v1014 = vadd.f32 0.0, %v1013
        %1015 = vmatmul.bf16.gmra.mxu0 %v988
        %v1016 = vpop.f32.mrf.mxu0
        %v1017 = vadd.f32 0.0, %v1016
        %v1018 = vpop.f32.mrf.mxu0
        %v1019 = vadd.f32 0.0, %v1018
        %1020 = vdwg.mxu0
        %v1021 = vpack.c.bf16 %v1012, %v1012
        %v1022 = vpack.c.bf16 %v1014, %v1014
        %v1023 = vpack.c.bf16 %v1017, %v1017
        %v1024 = vpack.c.bf16 %v1019, %v1019
        %1025 = vxpose.xlu0.b32.start [1/16] %v541, 128
        %1026 = vxpose.xlu0.b32.cont [2/16] %v543, 128
        %1027 = vxpose.xlu0.b32.cont [3/16] %v546, 128
        %1028 = vxpose.xlu0.b32.cont [4/16] %v548, 128
        %1029 = vxpose.xlu0.b32.cont [5/16] 0.0, 128
        %1030 = vxpose.xlu0.b32.cont [6/16] 0.0, 128
        %1031 = vxpose.xlu0.b32.cont [7/16] 0.0, 128
        %1032 = vxpose.xlu0.b32.cont [8/16] 0.0, 128
        %1033 = vxpose.xlu0.b32.cont [9/16] 0.0, 128
        %1034 = vxpose.xlu0.b32.cont [10/16] 0.0, 128
        %1035 = vxpose.xlu0.b32.cont [11/16] 0.0, 128
        %1036 = vxpose.xlu0.b32.cont [12/16] 0.0, 128
        %1037 = vxpose.xlu0.b32.cont [13/16] 0.0, 128
        %1038 = vxpose.xlu0.b32.cont [14/16] 0.0, 128
        %1039 = vxpose.xlu0.b32.cont [15/16] 0.0, 128
        %1040 = vxpose.xlu0.b32.end [16/16] 0.0, 128
        %v1041 = vpop.trf.xlu0
        %v1042 = vpop.trf.xlu0
        %v1043 = vpop.trf.xlu0
        %v1044 = vpop.trf.xlu0
        %v1045 = vpop.trf.xlu0
        %v1046 = vpop.trf.xlu0
        %v1047 = vpop.trf.xlu0
        %v1048 = vpop.trf.xlu0
        %v1049 = vpop.trf.xlu0
        %v1050 = vpop.trf.xlu0
        %v1051 = vpop.trf.xlu0
        %v1052 = vpop.trf.xlu0
        %v1053 = vpop.trf.xlu0
        %v1054 = vpop.trf.xlu0
        %v1055 = vpop.trf.xlu0
        %v1056 = vpop.trf.xlu0
        %v1057 = vpack.c.bf16 %v1042, %v1041
        %v1058 = vpack.c.bf16 %v1044, %v1043
        %v1059 = vpack.c.bf16 %v1046, %v1045
        %v1060 = vpack.c.bf16 %v1048, %v1047
        %v1061 = vpack.c.bf16 %v553, %v551
        %v1062 = vpack.c.bf16 %v558, %v556
        %v1064 = vsel %vm473, %v1057, 0
        %v1067 = vsel %vm473, %v1058, 0
        %v1070 = vsel %vm473, %v1059, 0
        %v1073 = vsel %vm473, %v1060, 0
        %1075 = vmatpush.bf16.msra.mxu0 0
        %1076 = vmatpush.bf16.msra.mxu0 0
        %1077 = vmatpush.bf16.msra.mxu0 0
        %1078 = vmatpush.bf16.msra.mxu0 0
        %1079 = vmatpush.bf16.msra.mxu0 0
        %1080 = vmatpush.bf16.msra.mxu0 0
        %1081 = vmatpush.bf16.msra.mxu0 %v1062
        %1082 = vmatpush.bf16.msra.mxu0 %v1061
        %1083 = vmatmul.bf16.gmra.mxu0 %v1064
        %v1084 = vpop.f32.mrf.mxu0
        %v1085 = vadd.f32 0.0, %v1084
        %v1086 = vpop.f32.mrf.mxu0
        %v1087 = vadd.f32 0.0, %v1086
        %1088 = vmatmul.bf16.gmra.mxu0 %v1067
        %v1089 = vpop.f32.mrf.mxu0
        %v1090 = vadd.f32 0.0, %v1089
        %v1091 = vpop.f32.mrf.mxu0
        %v1092 = vadd.f32 0.0, %v1091
        %1093 = vmatmul.bf16.gmra.mxu0 %v1070
        %v1094 = vpop.f32.mrf.mxu0
        %v1095 = vadd.f32 0.0, %v1094
        %v1096 = vpop.f32.mrf.mxu0
        %v1097 = vadd.f32 0.0, %v1096
        %1098 = vmatmul.bf16.gmra.mxu0 %v1073
        %v1099 = vpop.f32.mrf.mxu0
        %v1100 = vadd.f32 0.0, %v1099
        %v1101 = vpop.f32.mrf.mxu0
        %v1102 = vadd.f32 0.0, %v1101
        %1103 = vdwg.mxu0
        %v1104 = vsel %vm649, %v1085, -inf
        %1105 = vmax.xlane.f32.xlu0 %v1104
        %v1106 = vpop.xlane.xlu0 %1105
        %v1107 = vsel %vm649, %v1087, -inf
        %1108 = vmax.xlane.f32.xlu0 %v1107
        %v1109 = vpop.xlane.xlu0 %1108
        %v1110 = vsel %vm649, %v1090, -inf
        %1111 = vmax.xlane.f32.xlu0 %v1110
        %v1112 = vpop.xlane.xlu0 %1111
        %v1113 = vsel %vm649, %v1092, -inf
        %1114 = vmax.xlane.f32.xlu0 %v1113
        %v1115 = vpop.xlane.xlu0 %1114
        %v1116 = vsel %vm649, %v1095, -inf
        %1117 = vmax.xlane.f32.xlu0 %v1116
        %v1118 = vpop.xlane.xlu0 %1117
        %v1119 = vsel %vm649, %v1097, -inf
        %1120 = vmax.xlane.f32.xlu0 %v1119
        %v1121 = vpop.xlane.xlu0 %1120
        %v1122 = vsel %vm649, %v1100, -inf
        %1123 = vmax.xlane.f32.xlu0 %v1122
        %v1124 = vpop.xlane.xlu0 %1123
        %v1125 = vsel %vm649, %v1102, -inf
        %1126 = vmax.xlane.f32.xlu0 %v1125
        %v1127 = vpop.xlane.xlu0 %1126
        %v1128 = vsub.f32 %v1085, %v1106
        %v1129 = vsub.f32 %v1087, %v1109
        %v1130 = vsub.f32 %v1090, %v1112
        %v1131 = vsub.f32 %v1092, %v1115
        %v1132 = vsub.f32 %v1095, %v1118
        %v1133 = vsub.f32 %v1097, %v1121
        %v1134 = vsub.f32 %v1100, %v1124
        %v1135 = vsub.f32 %v1102, %v1127
        %v1136 = vmul.f32 %v1128, 1.442695
        %v1137 = vpow.pop %v1136
        %v1138 = vmul.f32 %v1129, 1.442695
        %v1139 = vpow.pop %v1138
        %v1140 = vmul.f32 %v1130, 1.442695
        %v1141 = vpow.pop %v1140
        %v1142 = vmul.f32 %v1131, 1.442695
        %v1143 = vpow.pop %v1142
        %v1144 = vmul.f32 %v1132, 1.442695
        %v1145 = vpow.pop %v1144
        %v1146 = vmul.f32 %v1133, 1.442695
        %v1147 = vpow.pop %v1146
        %v1148 = vmul.f32 %v1134, 1.442695
        %v1149 = vpow.pop %v1148
        %v1150 = vmul.f32 %v1135, 1.442695
        %v1151 = vpow.pop %v1150
        %v1152 = vsel %vm649, %v1137, 0.0
        %1153 = vadd.xlane.f32.xlu0 %v1152
        %v1154 = vpop.xlane.xlu0 %1153
        %v1155 = vsel %vm649, %v1139, 0.0
        %1156 = vadd.xlane.f32.xlu0 %v1155
        %v1157 = vpop.xlane.xlu0 %1156
        %v1158 = vsel %vm649, %v1141, 0.0
        %1159 = vadd.xlane.f32.xlu0 %v1158
        %v1160 = vpop.xlane.xlu0 %1159
        %v1161 = vsel %vm649, %v1143, 0.0
        %1162 = vadd.xlane.f32.xlu0 %v1161
        %v1163 = vpop.xlane.xlu0 %1162
        %v1164 = vsel %vm649, %v1145, 0.0
        %1165 = vadd.xlane.f32.xlu0 %v1164
        %v1166 = vpop.xlane.xlu0 %1165
        %v1167 = vsel %vm649, %v1147, 0.0
        %1168 = vadd.xlane.f32.xlu0 %v1167
        %v1169 = vpop.xlane.xlu0 %1168
        %v1170 = vsel %vm649, %v1149, 0.0
        %1171 = vadd.xlane.f32.xlu0 %v1170
        %v1172 = vpop.xlane.xlu0 %1171
        %v1173 = vsel %vm649, %v1151, 0.0
        %1174 = vadd.xlane.f32.xlu0 %v1173
        %v1175 = vpop.xlane.xlu0 %1174
        %v1176 = vrcp.pop %v1154
        %v1177 = vrcp.pop %v1157
        %v1178 = vrcp.pop %v1160
        %v1179 = vrcp.pop %v1163
        %v1180 = vrcp.pop %v1166
        %v1181 = vrcp.pop %v1169
        %v1182 = vrcp.pop %v1172
        %v1183 = vrcp.pop %v1175
        %v1184 = vmul.f32 %v1137, %v1176
        %v1185 = vmul.f32 %v1139, %v1177
        %v1186 = vmul.f32 %v1141, %v1178
        %v1187 = vmul.f32 %v1143, %v1179
        %v1188 = vmul.f32 %v1145, %v1180
        %v1189 = vmul.f32 %v1147, %v1181
        %v1190 = vmul.f32 %v1149, %v1182
        %v1191 = vmul.f32 %v1151, %v1183
        %v1192 = vpack.c.bf16 %v563, %v561
        %v1193 = vpack.c.bf16 %v568, %v566
        %v1194 = vpack.c.bf16 %v1185, %v1184
        %v1195 = vpack.c.bf16 %v1187, %v1186
        %v1196 = vpack.c.bf16 %v1189, %v1188
        %v1197 = vpack.c.bf16 %v1191, %v1190
        %v1199 = vsel %vm649, %v1192, 0
        %v1202 = vsel %vm649, %v1193, 0
        %v1205 = vsel %vm649, %v1194, 0
        %v1208 = vsel %vm649, %v1195, 0
        %v1211 = vsel %vm649, %v1196, 0
        %v1214 = vsel %vm649, %v1197, 0
        %1216 = vmatpush.bf16.xpose.msra.mxu0 0
        %1217 = vmatpush.bf16.xpose.msra.mxu0 0
        %1218 = vmatpush.bf16.xpose.msra.mxu0 0
        %1219 = vmatpush.bf16.xpose.msra.mxu0 0
        %1220 = vmatpush.bf16.xpose.msra.mxu0 %v1214
        %1221 = vmatpush.bf16.xpose.msra.mxu0 %v1211
        %1222 = vmatpush.bf16.xpose.msra.mxu0 %v1208
        %1223 = vmatpush.bf16.xpose.msra.mxu0 %v1205
        %1224 = vmatmul.bf16.gmra.mxu0 %v1199
        %v1225 = vpop.f32.mrf.mxu0
        %v1226 = vadd.f32 0.0, %v1225
        %v1227 = vpop.f32.mrf.mxu0
        %v1228 = vadd.f32 0.0, %v1227
        %1229 = vmatmul.bf16.gmra.mxu0 %v1202
        %v1230 = vpop.f32.mrf.mxu0
        %v1231 = vadd.f32 0.0, %v1230
        %v1232 = vpop.f32.mrf.mxu0
        %v1233 = vadd.f32 0.0, %v1232
        %1234 = vdwg.mxu0
        %v1235 = vpack.c.bf16 %v1226, %v1226
        %v1236 = vpack.c.bf16 %v1228, %v1228
        %v1237 = vpack.c.bf16 %v1231, %v1231
        %v1238 = vpack.c.bf16 %v1233, %v1233
        %1243 = vrot.lane.b32.xlu0 %v541, 64
        %v1244 = vpop.permute.xlu0 %1243
        %1245 = vrot.lane.b32.xlu0 %v543, 64
        %v1246 = vpop.permute.xlu0 %1245
        %1247 = vrot.lane.b32.xlu0 %v546, 64
        %v1248 = vpop.permute.xlu0 %1247
        %1249 = vrot.lane.b32.xlu0 %v548, 64
        %v1250 = vpop.permute.xlu0 %1249
        %1255 = vxpose.xlu0.b32.start [1/16] %v1244, 128
        %1256 = vxpose.xlu0.b32.cont [2/16] %v1246, 128
        %1257 = vxpose.xlu0.b32.cont [3/16] %v1248, 128
        %1258 = vxpose.xlu0.b32.cont [4/16] %v1250, 128
        %1259 = vxpose.xlu0.b32.cont [5/16] 0.0, 128
        %1260 = vxpose.xlu0.b32.cont [6/16] 0.0, 128
        %1261 = vxpose.xlu0.b32.cont [7/16] 0.0, 128
        %1262 = vxpose.xlu0.b32.cont [8/16] 0.0, 128
        %1263 = vxpose.xlu0.b32.cont [9/16] 0.0, 128
        %1264 = vxpose.xlu0.b32.cont [10/16] 0.0, 128
        %1265 = vxpose.xlu0.b32.cont [11/16] 0.0, 128
        %1266 = vxpose.xlu0.b32.cont [12/16] 0.0, 128
        %1267 = vxpose.xlu0.b32.cont [13/16] 0.0, 128
        %1268 = vxpose.xlu0.b32.cont [14/16] 0.0, 128
        %1269 = vxpose.xlu0.b32.cont [15/16] 0.0, 128
        %1270 = vxpose.xlu0.b32.end [16/16] 0.0, 128
        %v1271 = vpop.trf.xlu0
        %v1272 = vpop.trf.xlu0
        %v1273 = vpop.trf.xlu0
        %v1274 = vpop.trf.xlu0
        %v1275 = vpop.trf.xlu0
        %v1276 = vpop.trf.xlu0
        %v1277 = vpop.trf.xlu0
        %v1278 = vpop.trf.xlu0
        %v1279 = vpop.trf.xlu0
        %v1280 = vpop.trf.xlu0
        %v1281 = vpop.trf.xlu0
        %v1282 = vpop.trf.xlu0
        %v1283 = vpop.trf.xlu0
        %v1284 = vpop.trf.xlu0
        %v1285 = vpop.trf.xlu0
        %v1286 = vpop.trf.xlu0
        %v1287 = vpack.c.bf16 %v1272, %v1271
        %v1288 = vpack.c.bf16 %v1274, %v1273
        %v1289 = vpack.c.bf16 %v1276, %v1275
        %v1290 = vpack.c.bf16 %v1278, %v1277
        %1293 = vrot.lane.b32.xlu0 %v1061, 64
        %v1294 = vpop.permute.xlu0 %1293
        %1295 = vrot.lane.b32.xlu0 %v1062, 64
        %v1296 = vpop.permute.xlu0 %1295
        %v1300 = vsel %vm473, %v1287, 0
        %v1303 = vsel %vm473, %v1288, 0
        %v1306 = vsel %vm473, %v1289, 0
        %v1309 = vsel %vm473, %v1290, 0
        %1311 = vmatpush.bf16.msra.mxu0 0
        %1312 = vmatpush.bf16.msra.mxu0 0
        %1313 = vmatpush.bf16.msra.mxu0 0
        %1314 = vmatpush.bf16.msra.mxu0 0
        %1315 = vmatpush.bf16.msra.mxu0 0
        %1316 = vmatpush.bf16.msra.mxu0 0
        %1317 = vmatpush.bf16.msra.mxu0 %v1296
        %1318 = vmatpush.bf16.msra.mxu0 %v1294
        %1319 = vmatmul.bf16.gmra.mxu0 %v1300
        %v1320 = vpop.f32.mrf.mxu0
        %v1321 = vadd.f32 0.0, %v1320
        %v1322 = vpop.f32.mrf.mxu0
        %v1323 = vadd.f32 0.0, %v1322
        %1324 = vmatmul.bf16.gmra.mxu0 %v1303
        %v1325 = vpop.f32.mrf.mxu0
        %v1326 = vadd.f32 0.0, %v1325
        %v1327 = vpop.f32.mrf.mxu0
        %v1328 = vadd.f32 0.0, %v1327
        %1329 = vmatmul.bf16.gmra.mxu0 %v1306
        %v1330 = vpop.f32.mrf.mxu0
        %v1331 = vadd.f32 0.0, %v1330
        %v1332 = vpop.f32.mrf.mxu0
        %v1333 = vadd.f32 0.0, %v1332
        %1334 = vmatmul.bf16.gmra.mxu0 %v1309
        %v1335 = vpop.f32.mrf.mxu0
        %v1336 = vadd.f32 0.0, %v1335
        %v1337 = vpop.f32.mrf.mxu0
        %v1338 = vadd.f32 0.0, %v1337
        %1339 = vdwg.mxu0
        %v1340 = vsel %vm649, %v1321, -inf
        %1341 = vmax.xlane.f32.xlu0 %v1340
        %v1342 = vpop.xlane.xlu0 %1341
        %v1343 = vsel %vm649, %v1323, -inf
        %1344 = vmax.xlane.f32.xlu0 %v1343
        %v1345 = vpop.xlane.xlu0 %1344
        %v1346 = vsel %vm649, %v1326, -inf
        %1347 = vmax.xlane.f32.xlu0 %v1346
        %v1348 = vpop.xlane.xlu0 %1347
        %v1349 = vsel %vm649, %v1328, -inf
        %1350 = vmax.xlane.f32.xlu0 %v1349
        %v1351 = vpop.xlane.xlu0 %1350
        %v1352 = vsel %vm649, %v1331, -inf
        %1353 = vmax.xlane.f32.xlu0 %v1352
        %v1354 = vpop.xlane.xlu0 %1353
        %v1355 = vsel %vm649, %v1333, -inf
        %1356 = vmax.xlane.f32.xlu0 %v1355
        %v1357 = vpop.xlane.xlu0 %1356
        %v1358 = vsel %vm649, %v1336, -inf
        %1359 = vmax.xlane.f32.xlu0 %v1358
        %v1360 = vpop.xlane.xlu0 %1359
        %v1361 = vsel %vm649, %v1338, -inf
        %1362 = vmax.xlane.f32.xlu0 %v1361
        %v1363 = vpop.xlane.xlu0 %1362
        %v1364 = vsub.f32 %v1321, %v1342
        %v1365 = vsub.f32 %v1323, %v1345
        %v1366 = vsub.f32 %v1326, %v1348
        %v1367 = vsub.f32 %v1328, %v1351
        %v1368 = vsub.f32 %v1331, %v1354
        %v1369 = vsub.f32 %v1333, %v1357
        %v1370 = vsub.f32 %v1336, %v1360
        %v1371 = vsub.f32 %v1338, %v1363
        %v1372 = vmul.f32 %v1364, 1.442695
        %v1373 = vpow.pop %v1372
        %v1374 = vmul.f32 %v1365, 1.442695
        %v1375 = vpow.pop %v1374
        %v1376 = vmul.f32 %v1366, 1.442695
        %v1377 = vpow.pop %v1376
        %v1378 = vmul.f32 %v1367, 1.442695
        %v1379 = vpow.pop %v1378
        %v1380 = vmul.f32 %v1368, 1.442695
        %v1381 = vpow.pop %v1380
        %v1382 = vmul.f32 %v1369, 1.442695
        %v1383 = vpow.pop %v1382
        %v1384 = vmul.f32 %v1370, 1.442695
        %v1385 = vpow.pop %v1384
        %v1386 = vmul.f32 %v1371, 1.442695
        %v1387 = vpow.pop %v1386
        %v1388 = vsel %vm649, %v1373, 0.0
        %1389 = vadd.xlane.f32.xlu0 %v1388
        %v1390 = vpop.xlane.xlu0 %1389
        %v1391 = vsel %vm649, %v1375, 0.0
        %1392 = vadd.xlane.f32.xlu0 %v1391
        %v1393 = vpop.xlane.xlu0 %1392
        %v1394 = vsel %vm649, %v1377, 0.0
        %1395 = vadd.xlane.f32.xlu0 %v1394
        %v1396 = vpop.xlane.xlu0 %1395
        %v1397 = vsel %vm649, %v1379, 0.0
        %1398 = vadd.xlane.f32.xlu0 %v1397
        %v1399 = vpop.xlane.xlu0 %1398
        %v1400 = vsel %vm649, %v1381, 0.0
        %1401 = vadd.xlane.f32.xlu0 %v1400
        %v1402 = vpop.xlane.xlu0 %1401
        %v1403 = vsel %vm649, %v1383, 0.0
        %1404 = vadd.xlane.f32.xlu0 %v1403
        %v1405 = vpop.xlane.xlu0 %1404
        %v1406 = vsel %vm649, %v1385, 0.0
        %1407 = vadd.xlane.f32.xlu0 %v1406
        %v1408 = vpop.xlane.xlu0 %1407
        %v1409 = vsel %vm649, %v1387, 0.0
        %1410 = vadd.xlane.f32.xlu0 %v1409
        %v1411 = vpop.xlane.xlu0 %1410
        %v1412 = vrcp.pop %v1390
        %v1413 = vrcp.pop %v1393
        %v1414 = vrcp.pop %v1396
        %v1415 = vrcp.pop %v1399
        %v1416 = vrcp.pop %v1402
        %v1417 = vrcp.pop %v1405
        %v1418 = vrcp.pop %v1408
        %v1419 = vrcp.pop %v1411
        %v1420 = vmul.f32 %v1373, %v1412
        %v1421 = vmul.f32 %v1375, %v1413
        %v1422 = vmul.f32 %v1377, %v1414
        %v1423 = vmul.f32 %v1379, %v1415
        %v1424 = vmul.f32 %v1381, %v1416
        %v1425 = vmul.f32 %v1383, %v1417
        %v1426 = vmul.f32 %v1385, %v1418
        %v1427 = vmul.f32 %v1387, %v1419
        %v1428 = vpack.c.bf16 %v1421, %v1420
        %v1429 = vpack.c.bf16 %v1423, %v1422
        %v1430 = vpack.c.bf16 %v1425, %v1424
        %v1431 = vpack.c.bf16 %v1427, %v1426
        %1434 = vrot.lane.b32.xlu0 %v1192, 64
        %v1435 = vpop.permute.xlu0 %1434
        %1436 = vrot.lane.b32.xlu0 %v1193, 64
        %v1437 = vpop.permute.xlu0 %1436
        %v1439 = vsel %vm649, %v1435, 0
        %v1442 = vsel %vm649, %v1437, 0
        %v1445 = vsel %vm649, %v1428, 0
        %v1448 = vsel %vm649, %v1429, 0
        %v1451 = vsel %vm649, %v1430, 0
        %v1454 = vsel %vm649, %v1431, 0
        %1456 = vmatpush.bf16.xpose.msra.mxu0 0
        %1457 = vmatpush.bf16.xpose.msra.mxu0 0
        %1458 = vmatpush.bf16.xpose.msra.mxu0 0
        %1459 = vmatpush.bf16.xpose.msra.mxu0 0
        %1460 = vmatpush.bf16.xpose.msra.mxu0 %v1454
        %1461 = vmatpush.bf16.xpose.msra.mxu0 %v1451
        %1462 = vmatpush.bf16.xpose.msra.mxu0 %v1448
        %1463 = vmatpush.bf16.xpose.msra.mxu0 %v1445
        %1464 = vmatmul.bf16.gmra.mxu0 %v1439
        %v1465 = vpop.f32.mrf.mxu0
        %v1466 = vadd.f32 0.0, %v1465
        %v1467 = vpop.f32.mrf.mxu0
        %v1468 = vadd.f32 0.0, %v1467
        %1469 = vmatmul.bf16.gmra.mxu0 %v1442
        %v1470 = vpop.f32.mrf.mxu0
        %v1471 = vadd.f32 0.0, %v1470
        %v1472 = vpop.f32.mrf.mxu0
        %v1473 = vadd.f32 0.0, %v1472
        %1474 = vdwg.mxu0
        %v1475 = vpack.c.bf16 %v1466, %v1466
        %v1476 = vpack.c.bf16 %v1468, %v1468
        %v1477 = vpack.c.bf16 %v1471, %v1471
        %v1478 = vpack.c.bf16 %v1473, %v1473
        %v1483 = vunpack.c.l.b16 %v781
        %v1484 = vunpack.c.l.b16 %v782
        %v1485 = vunpack.c.l.b16 %v783
        %v1486 = vunpack.c.l.b16 %v784
        %v1487 = vpack.c.b16 %v1484, %v1483
        %v1488 = vpack.c.b16 %v1486, %v1485
        %v1493 = vunpack.c.l.b16 %v1021
        %v1494 = vunpack.c.l.b16 %v1022
        %v1495 = vunpack.c.l.b16 %v1023
        %v1496 = vunpack.c.l.b16 %v1024
        %v1497 = vpack.c.b16 %v1494, %v1493
        %v1498 = vpack.c.b16 %v1496, %v1495
        %1499 = vrot.lane.b32.xlu0 %v1497, 64
        %v1500 = vpop.permute.xlu0 %1499
        %1501 = vrot.lane.b32.xlu0 %v1498, 64
        %v1502 = vpop.permute.xlu0 %1501
        %v1507 = vunpack.c.l.b16 %v1235
        %v1508 = vunpack.c.l.b16 %v1236
        %v1509 = vunpack.c.l.b16 %v1237
        %v1510 = vunpack.c.l.b16 %v1238
        %v1511 = vpack.c.b16 %v1508, %v1507
        %v1512 = vpack.c.b16 %v1510, %v1509
        %v1517 = vunpack.c.l.b16 %v1475
        %v1518 = vunpack.c.l.b16 %v1476
        %v1519 = vunpack.c.l.b16 %v1477
        %v1520 = vunpack.c.l.b16 %v1478
        %v1521 = vpack.c.b16 %v1518, %v1517
        %v1522 = vpack.c.b16 %v1520, %v1519
        %1523 = vrot.lane.b32.xlu0 %v1521, 64
        %v1524 = vpop.permute.xlu0 %1523
        %1525 = vrot.lane.b32.xlu0 %v1522, 64
        %v1526 = vpop.permute.xlu0 %1525
        %v1529 = vsel %vm649, %v1487, %v1500
        %v1533 = vsel %vm649, %v1488, %v1502
        %v1537 = vsel %vm649, %v1511, %v1524
        %v1541 = vsel %vm649, %v1512, %v1526
        %1544 = vset.pattern.permute.xlu0 0
        %1545 = vperm.xlu0 %1544, %v283
        %v1546 = vpop.permute.xlu0 %1545
        %1549 = vset.pattern.permute.xlu0 0
        %1550 = vperm.xlu0 %1549, %v284
        %v1551 = vpop.permute.xlu0 %1550
        %1554 = vset.pattern.permute.xlu0 0
        %1555 = vperm.xlu0 %1554, %v285
        %v1556 = vpop.permute.xlu0 %1555
        %1559 = vset.pattern.permute.xlu0 0
        %1560 = vperm.xlu0 %1559, %v286
        %v1561 = vpop.permute.xlu0 %1560
        %v1567 = vunpack.c.l.b16 %v279
        %v1568 = vunpack.c.l.b16 %v280
        %v1569 = vunpack.c.l.b16 %v281
        %v1570 = vunpack.c.l.b16 %v282
        %v1571 = vpack.c.b16 %v1568, %v1567
        %v1572 = vpack.c.b16 %v1570, %v1569
        %v1574 = vsel %vm473, %v1571, 0
        %v1577 = vsel %vm473, %v1572, 0
        %1579 = vmatpush.bf16.msra.mxu0 0
        %1580 = vmatpush.bf16.msra.mxu0 0
        %1581 = vmatpush.bf16.msra.mxu0 0
        %1582 = vmatpush.bf16.msra.mxu0 0
        %1583 = vmatpush.bf16.msra.mxu0 0
        %1584 = vmatpush.bf16.msra.mxu0 0
        %1585 = vmatpush.bf16.msra.mxu0 %v1533
        %1586 = vmatpush.bf16.msra.mxu0 %v1529
        %1587 = vmatmul.bf16.gmra.mxu0 %v1574
        %v1588 = vpop.f32.mrf.mxu0
        %v1589 = vadd.f32 %v1546, %v1588
        %v1590 = vpop.f32.mrf.mxu0
        %v1591 = vadd.f32 %v1551, %v1590
        %1592 = vmatmul.bf16.gmra.mxu0 %v1577
        %v1593 = vpop.f32.mrf.mxu0
        %v1594 = vadd.f32 %v1556, %v1593
        %v1595 = vpop.f32.mrf.mxu0
        %v1596 = vadd.f32 %v1561, %v1595
        %1597 = vdwg.mxu0
        %1598 = vmatpush.bf16.msra.mxu0 0
        %1599 = vmatpush.bf16.msra.mxu0 0
        %1600 = vmatpush.bf16.msra.mxu0 0
        %1601 = vmatpush.bf16.msra.mxu0 0
        %1602 = vmatpush.bf16.msra.mxu0 0
        %1603 = vmatpush.bf16.msra.mxu0 0
        %1604 = vmatpush.bf16.msra.mxu0 %v1541
        %1605 = vmatpush.bf16.msra.mxu0 %v1537
        %1606 = vmatmul.bf16.gmra.mxu0 %v1574
        %v1607 = vpop.f32.mrf.mxu0
        %v1608 = vadd.f32 %v1546, %v1607
        %v1609 = vpop.f32.mrf.mxu0
        %v1610 = vadd.f32 %v1551, %v1609
        %1611 = vmatmul.bf16.gmra.mxu0 %v1577
        %v1612 = vpop.f32.mrf.mxu0
        %v1613 = vadd.f32 %v1556, %v1612
        %v1614 = vpop.f32.mrf.mxu0
        %v1615 = vadd.f32 %v1561, %v1614
        %1616 = vdwg.mxu0
        %v1617 = vadd.f32 %v1589, %v287
        %v1618 = vadd.f32 %v1608, %v288
        %v1619 = vadd.f32 %v1591, %v289
        %v1620 = vadd.f32 %v1610, %v290
        %v1621 = vadd.f32 %v1594, %v291
        %v1622 = vadd.f32 %v1613, %v292
        %v1623 = vadd.f32 %v1596, %v293
        %v1624 = vadd.f32 %v1615, %v294
        %1625 = vst [vmem:[%s244] sm:$0xff] %v1617
        %1626 = vst [vmem:[%s244 + $0x8] sm:$0xff] %v1618
        %1627 = vst [vmem:[%s244 + $0x10] sm:$0xff] %v1619
        %1628 = vst [vmem:[%s244 + $0x18] sm:$0xff] %v1620
        %1629 = vst [vmem:[%s244 + $0x20] sm:$0xff] %v1621
        %1630 = vst [vmem:[%s244 + $0x28] sm:$0xff] %v1622
        %1631 = vst [vmem:[%s244 + $0x30] sm:$0xff] %v1623
        %1632 = vst [vmem:[%s244 + $0x38] sm:$0xff] %v1624
        %s1633 = sand.u32 %s159, 1
        %s1634 = scalar_lea.sflag [#allocation3], %s1633
        %s1635 = sand.u32 %s159, 1
        %s1636 = smul.addr %s1635, 64
        %s1637 = scalar_lea.vmem [#allocation2], %s1636
        // Predicated region
        $region45: #{tpu_custom_call.1} parent=43 // pred_check
          %p1638 = pneg %p169
        $region46: #{tpu_custom_call.1} parent=43 // pred_check_branch
          %1640 = sbr.rel (%p1638) target = $region48
        $region47: #{tpu_custom_call.1} parent=43 // pred_region
          %1642 = vsyncadd %s1634, 0
          %s1643 = smul.addr %s20, 8
          %s1644 = smul.addr %s1643, 8
          %s1645 = scalar_lea.hbm %s6, %s1644
          %s1646 = sshll.u32 %s1637, 4
          %s1647 = int_to_ptr.vmem [resolvable:$true] %s1646
          %s1648 = sshll.u32 %s1645, 4
          %s1649 = int_to_ptr.hbm [resolvable:$true] %s1648
          %1654 = dma.vmem_to_hbm [thread:$0]  %s1647, 1024, %s1649, %s1634, 256, 256, 16
        $region48: #{tpu_custom_call.1} parent=43 // pred_fallthru
          _
      $region44: #{tpu_custom_call.1} parent=5 // pred_fallthru
        _
      %p1655 = scmp.le.s32.totalorder 2, %s15
      // Predicated region
      $region49: #{tpu_custom_call.1} parent=5 // pred_check
        %p1656 = pneg %p1655
      $region50: #{tpu_custom_call.1} parent=5 // pred_check_branch
        %1658 = sbr.rel (%p1656) target = $region52
      $region51: #{tpu_custom_call.1} parent=5 // pred_region
        %s1659 = ssub.s32 %s15, 2
        // Predicated region
        $region53: #{tpu_custom_call.1} parent=51 // pred_check
          %p1660 = pneg %p175
        $region54: #{tpu_custom_call.1} parent=51 // pred_check_branch
          %1662 = sbr.rel (%p1660) target = $region56
        $region55: #{tpu_custom_call.1} parent=51 // pred_region
          %s1663 = sand.u32 %s160, 1
          %s1664 = scalar_lea.sflag [#allocation3], %s1663
          %s1665 = sand.u32 %s160, 1
          %s1666 = smul.addr %s1665, 64
          %s1667 = scalar_lea.vmem [#allocation2], %s1666
          %1669 = dma.done %s1664, 1024
        $region56: #{tpu_custom_call.1} parent=51 // pred_fallthru
          _
      $region52: #{tpu_custom_call.1} parent=5 // pred_fallthru
        _
    $region6: #{tpu_custom_call.1} parent=1 // loop_footer
      %s19 = sadd.s32 1, %s15
    $region7: #{tpu_custom_call.1} parent=1 // loop_footer_branch
      %14 = sbr.rel target = $region3
    $region8: #{tpu_custom_call.1} parent=1 // loop_exit
      _
    %1670 = vsyncpa [#allocation3], 1
    %s1671 = scalar_lea.sflag [#allocation3], 1
    %1672 = vsyncpa %s1671, 1

</llo_original>
